<compile_context>
chip_gen: v5e
topology: v5e:2x2
jax: 0.10.0
libtpu: 0.0.40
codegen_flags: <defaults>
</compile_context>

<pallas_src>
import functools
import math

import jax
import jax.numpy as jnp
from jax.experimental import pallas as pl
from jax.experimental.pallas import tpu as pltpu

LANE = 128
RESIDENT_BUDGET = 40 * 1024 * 1024   # leave headroom under v7x's 64 MiB VMEM


def _round_up(v, m):
    return ((v + m - 1) // m) * m


def _pad2(x, rows, cols):
    return jnp.pad(x, ((0, rows - x.shape[0]), (0, cols - x.shape[1])))


def _vmem_estimate(n_pad, f_in, f_out, block_rows, block_k, resident_h,
                   extra=0):
    """Rough VMEM bytes for a propagate kernel (double-buffered inputs)."""
    bf16, f32 = 2, 4
    a_tiles = 2 * block_rows * block_k * bf16
    h_bytes = (2 * n_pad * f_in * bf16 if resident_h
               else 2 * block_k * f_in * bf16)
    w_bytes = 2 * f_in * f_out * bf16
    b_bytes = 2 * f_out * f32
    out_bytes = 2 * block_rows * f_out * bf16
    acc_bytes = block_rows * f_in * f32
    return a_tiles + h_bytes + w_bytes + b_bytes + out_bytes + acc_bytes + extra


def _vmem_limit(estimate):
    return int(min(60 * 1024 * 1024, max(32 * 1024 * 1024, estimate * 3 // 2)))


# ---------------------------------------------------------------------------
# Kernel 1: one GCN layer for both branches (branch-concatenated on lanes)
#   out = relu( (A_hat @ H) @ W_cat + b_cat )
# grid = (row_blocks, k_blocks); k (reduction) innermost.
# H is VMEM-resident (constant index map -> fetched once) when it fits.
# ---------------------------------------------------------------------------
def _propagate_kernel(a_ref, h_ref, w_ref, b_ref, out_ref, acc_ref,
                      *, block_k, resident_h):
    k = pl.program_id(1)

    @pl.when(k == 0)
    def _():
        acc_ref[...] = jnp.zeros_like(acc_ref)

    if resident_h:
        start = pl.multiple_of(k * block_k, block_k)
        h_blk = h_ref[pl.ds(start, block_k), :]
    else:
        h_blk = h_ref[...]

    # bf16 x bf16 -> f32 accumulation on the MXU
    acc_ref[...] += jnp.dot(a_ref[...], h_blk,
                            preferred_element_type=jnp.float32)

    @pl.when(k == pl.num_programs(1) - 1)
    def _():
        y = jnp.dot(acc_ref[...].astype(jnp.bfloat16), w_ref[...],
                    preferred_element_type=jnp.float32) + b_ref[...]
        out_ref[...] = jnp.maximum(y, 0.0).astype(out_ref.dtype)


def _propagate(a, h, w, b, *, block_rows, block_k, resident_h, out_dtype,
               vmem_limit_bytes):
    n = a.shape[0]
    f_in = h.shape[1]
    f_out = w.shape[1]
    grid = (n // block_rows, n // block_k)
    if resident_h:
        h_spec = pl.BlockSpec((n, f_in), lambda i, k: (0, 0))
    else:
        h_spec = pl.BlockSpec((block_k, f_in), lambda i, k: (k, 0))
    kern = functools.partial(_propagate_kernel, block_k=block_k,
                             resident_h=resident_h)
    return pl.pallas_call(
        kern,
        out_shape=jax.ShapeDtypeStruct((n, f_out), out_dtype),
        grid=grid,
        in_specs=[
            pl.BlockSpec((block_rows, block_k), lambda i, k: (i, k)),  # A tile
            h_spec,                                                    # H
            pl.BlockSpec((f_in, f_out), lambda i, k: (0, 0)),          # W (resident)
            pl.BlockSpec((1, f_out), lambda i, k: (0, 0)),             # bias
        ],
        out_specs=pl.BlockSpec((block_rows, f_out), lambda i, k: (i, 0)),
        scratch_shapes=[pltpu.VMEM((block_rows, f_in), jnp.float32)],
        compiler_params=pltpu.CompilerParams(
            dimension_semantics=("parallel", "arbitrary"),
            vmem_limit_bytes=vmem_limit_bytes),
    )(a, h, w, b)


# ---------------------------------------------------------------------------
# Kernel 2: layer-2 propagate + fused global-add pooling + predictor MLP.
#   z      = relu( (A_hat @ H1) @ W2_cat + b2_cat )     (never hits HBM)
#   pooled += pool_block @ z                            (f32 VMEM accumulator)
#   online_q = relu(pooled_online @ Wp1 + bp1) @ Wp2 + bp2
#   target_y = pooled_target
# The pooled accumulator persists across the row axis -> grid is sequential.
# TODO(synk): per-core partial pooled sums would re-enable v7x megacore here.
# ---------------------------------------------------------------------------
def _layer2_fused_kernel(a_ref, h_ref, w_ref, b_ref, pool_ref,
                         wp1_ref, bp1_ref, wp2_ref, bp2_ref,
                         q_ref, y_ref, acc_ref, pooled_ref,
                         *, block_k, resident_h):
    i = pl.program_id(0)
    k = pl.program_id(1)
    last_i = pl.num_programs(0) - 1
    last_k = pl.num_programs(1) - 1

    @pl.when((i == 0) & (k == 0))
    def _():
        pooled_ref[...] = jnp.zeros_like(pooled_ref)

    @pl.when(k == 0)
    def _():
        acc_ref[...] = jnp.zeros_like(acc_ref)

    if resident_h:
        start = pl.multiple_of(k * block_k, block_k)
        h_blk = h_ref[pl.ds(start, block_k), :]
    else:
        h_blk = h_ref[...]

    acc_ref[...] += jnp.dot(a_ref[...], h_blk,
                            preferred_element_type=jnp.float32)

    @pl.when(k == last_k)
    def _():
        z = jnp.dot(acc_ref[...].astype(jnp.bfloat16), w_ref[...],
                    preferred_element_type=jnp.float32) + b_ref[...]
        z = jnp.maximum(z, 0.0).astype(jnp.bfloat16)
        pooled_ref[...] += jnp.dot(pool_ref[...], z,
                                   preferred_element_type=jnp.float32)

    @pl.when((i == last_i) & (k == last_k))
    def _():
        hp = q_ref.shape[1]
        pooled = pooled_ref[...]
        y_ref[...] = pooled[:, hp:].astype(y_ref.dtype)
        hq = jnp.dot(pooled[:, :hp].astype(jnp.bfloat16), wp1_ref[...],
                     preferred_element_type=jnp.float32) + bp1_ref[...]
        hq = jnp.maximum(hq, 0.0)
        q = jnp.dot(hq.astype(jnp.bfloat16), wp2_ref[...],
                    preferred_element_type=jnp.float32) + bp2_ref[...]
        q_ref[...] = q.astype(q_ref.dtype)


def _layer2_pool_predict(a, h, w, b, pool, wp1, bp1, wp2, bp2,
                         *, block_rows, block_k, resident_h, hid_pad,
                         vmem_limit_bytes):
    n = a.shape[0]
    f_in = h.shape[1]          # 2*hp
    f_out = w.shape[1]         # 2*hp
    b_pad = pool.shape[0]
    pp = wp1.shape[1]
    grid = (n // block_rows, n // block_k)
    if resident_h:
        h_spec = pl.BlockSpec((n, f_in), lambda i, k: (0, 0))
    else:
        h_spec = pl.BlockSpec((block_k, f_in), lambda i, k: (k, 0))
    kern = functools.partial(_layer2_fused_kernel, block_k=block_k,
                             resident_h=resident_h)
    out_shapes = (jax.ShapeDtypeStruct((b_pad, hid_pad), jnp.float32),
                  jax.ShapeDtypeStruct((b_pad, hid_pad), jnp.float32))
    return pl.pallas_call(
        kern,
        out_shape=out_shapes,
        grid=grid,
        in_specs=[
            pl.BlockSpec((block_rows, block_k), lambda i, k: (i, k)),   # A tile
            h_spec,                                                     # H1
            pl.BlockSpec((f_in, f_out), lambda i, k: (0, 0)),           # W2_cat
            pl.BlockSpec((1, f_out), lambda i, k: (0, 0)),              # b2_cat
            pl.BlockSpec((b_pad, block_rows), lambda i, k: (0, i)),     # pool
            pl.BlockSpec((hid_pad, pp), lambda i, k: (0, 0)),           # Wp1
            pl.BlockSpec((1, pp), lambda i, k: (0, 0)),                 # bp1
            pl.BlockSpec((pp, hid_pad), lambda i, k: (0, 0)),           # Wp2
            pl.BlockSpec((1, hid_pad), lambda i, k: (0, 0)),            # bp2
        ],
        out_specs=(pl.BlockSpec((b_pad, hid_pad), lambda i, k: (0, 0)),
                   pl.BlockSpec((b_pad, hid_pad), lambda i, k: (0, 0))),
        scratch_shapes=[pltpu.VMEM((block_rows, f_in), jnp.float32),
                        pltpu.VMEM((b_pad, f_out), jnp.float32)],
        compiler_params=pltpu.CompilerParams(
            dimension_semantics=("arbitrary", "arbitrary"),
            vmem_limit_bytes=vmem_limit_bytes),
    )(a, h, w, b, pool, wp1, bp1, wp2, bp2)


# ---------------------------------------------------------------------------
# Host-side glue
# ---------------------------------------------------------------------------
def build_norm_adj_padded(edge_index, num_nodes, n_pad, dtype=jnp.bfloat16):
    """GCN normalized adjacency D^{-1/2}(A+I)D^{-1/2}, built at padded size in
    bf16 (no separate f32 NxN materialization)."""
    src, dst = edge_index[0], edge_index[1]
    a = jnp.zeros((n_pad, n_pad), dtype)
    a = a.at[src, dst].set(1.0)
    a = a.at[dst, src].set(1.0)
    diag = jnp.arange(num_nodes)
    a = a.at[diag, diag].set(1.0)                       # robust to self loops
    deg = jnp.sum(a, axis=1, dtype=jnp.float32)
    dinv = jnp.where(deg > 0,
                     jax.lax.rsqrt(jnp.maximum(deg, 1e-12)),
                     jnp.zeros_like(deg))               # padded rows -> 0
    return (a * dinv[:, None] * dinv[None, :]).astype(dtype)


def laplace_gnn_forward(params, x, edge_index, batch, num_graphs,
                        ptb_max, ptb_min,
                        perturb_first=None, perturb_last=None,
                        block_rows=256, block_k=512):
    # TODO(synk): FLAG-style adversarial perturbations (perturb_first /
    # perturb_last) default to None in the reference forward; not applied.
    # TODO(synk): stochastic edge/feature augmentation is approximated by the
    # deterministic (1 - ptb_prob) feature-scaling surrogate.
    # TODO(synk): no custom VJP is defined; this is a forward-only kernel.
    n, f = x.shape
    hid = params["w2o"].shape[1]
    pred_hid = params["wp1"].shape[1]

    f_pad = _round_up(f, LANE)
    hp = _round_up(hid, LANE)
    pp = _round_up(pred_hid, LANE)

    # Clamp tiles so tiny graphs do not force huge padding; keep lane dims %128.
    n_min = _round_up(n, LANE)
    block_rows = max(LANE, min(block_rows, n_min))
    block_k = max(LANE, min(block_k, n_min))
    assert block_rows % 8 == 0 and block_k % LANE == 0
    n_pad = _round_up(n, math.lcm(block_rows, block_k))
    b_pad = _round_up(num_graphs, 16)        # 16 sublanes for bf16 pool packing

    a_pad = build_norm_adj_padded(edge_index, n, n_pad)               # bf16
    x_pad = _pad2(x, n_pad, f_pad).astype(jnp.bfloat16)
    pool_pad = _pad2(jax.nn.one_hot(batch, b_pad, dtype=jnp.bfloat16).T,
                     b_pad, n_pad)                                    # [B_pad, N_pad]

    s1 = jnp.float32(1.0 - ptb_max)   # view 1 (online) feature scale
    s2 = jnp.float32(1.0 - ptb_min)   # view 2 (target) feature scale

    # layer 1: scales folded into weights, branches concatenated on lanes
    w1_cat = jnp.zeros((f_pad, 2 * hp), jnp.float32)
    w1_cat = w1_cat.at[:f, :hid].set(s1 * params["w1o"])
    w1_cat = w1_cat.at[:f, hp:hp + hid].set(s2 * params["w1t"])
    w1_cat = w1_cat.astype(jnp.bfloat16)
    b1_cat = jnp.zeros((1, 2 * hp), jnp.float32)
    b1_cat = b1_cat.at[:, :hid].set(params["b1o"])
    b1_cat = b1_cat.at[:, hp:hp + hid].set(params["b1t"])

    # layer 2: block-diagonal weights keep the two branches independent
    w2_cat = jnp.zeros((2 * hp, 2 * hp), jnp.float32)
    w2_cat = w2_cat.at[:hid, :hid].set(params["w2o"])
    w2_cat = w2_cat.at[hp:hp + hid, hp:hp + hid].set(params["w2t"])
    w2_cat = w2_cat.astype(jnp.bfloat16)
    b2_cat = jnp.zeros((1, 2 * hp), jnp.float32)
    b2_cat = b2_cat.at[:, :hid].set(params["b2o"])
    b2_cat = b2_cat.at[:, hp:hp + hid].set(params["b2t"])

    # predictor MLP, padded to 128 lanes (zero pads keep valid lanes exact)
    wp1_pad = jnp.zeros((hp, pp), jnp.float32).at[:hid, :pred_hid].set(
        params["wp1"]).astype(jnp.bfloat16)
    bp1_pad = jnp.zeros((1, pp), jnp.float32).at[:, :pred_hid].set(params["bp1"])
    wp2_pad = jnp.zeros((pp, hp), jnp.float32).at[:pred_hid, :hid].set(
        params["wp2"]).astype(jnp.bfloat16)
    bp2_pad = jnp.zeros((1, hp), jnp.float32).at[:, :hid].set(params["bp2"])

    # --- VMEM budgets: resident H when it fits; explicit scoped limits -------
    est1 = _vmem_estimate(n_pad, f_pad, 2 * hp, block_rows, block_k, True)
    resident1 = est1 <= RESIDENT_BUDGET
    if not resident1:
        est1 = _vmem_estimate(n_pad, f_pad, 2 * hp, block_rows, block_k, False)

    extra2 = (2 * b_pad * block_rows * 2       # pool tile (double-buffered)
              + b_pad * 2 * hp * 4             # pooled f32 scratch
              + 2 * (hp * pp + pp * hp) * 2    # predictor weights
              + 2 * (pp + hp) * 4              # predictor biases
              + 4 * b_pad * hp * 4)            # q / y outputs
    est2 = _vmem_estimate(n_pad, 2 * hp, 2 * hp, block_rows, block_k, True,
                          extra2)
    resident2 = est2 <= RESIDENT_BUDGET
    if not resident2:
        est2 = _vmem_estimate(n_pad, 2 * hp, 2 * hp, block_rows, block_k,
                              False, extra2)

    # GCN layer 1: relu( (A @ X) @ [s1*W1o | s2*W1t] + b )   (A@X done once)
    # NOTE: padded node rows of h1_cat equal relu(b1_cat), not zero; they are
    # harmless because A's and pool's padded columns are exactly zero.
    h1_cat = _propagate(a_pad, x_pad, w1_cat, b1_cat,
                        block_rows=block_rows, block_k=block_k,
                        resident_h=resident1, out_dtype=jnp.bfloat16,
                        vmem_limit_bytes=_vmem_limit(est1))

    # GCN layer 2 + global add pool (both branches) + predictor (online), fused
    q_pad, y_pad = _layer2_pool_predict(
        a_pad, h1_cat, w2_cat, b2_cat, pool_pad,
        wp1_pad, bp1_pad, wp2_pad, bp2_pad,
        block_rows=block_rows, block_k=block_k, resident_h=resident2,
        hid_pad=hp, vmem_limit_bytes=_vmem_limit(est2))

    online_q = q_pad[:num_graphs, :hid]
    # target branch runs under torch.no_grad() / .detach()
    target_y = jax.lax.stop_gradient(y_pad[:num_graphs, :hid])
    return online_q, target_y


def init_params(key, in_dim, hid_dim, pred_hid):
    ks = jax.random.split(key, 8)

    def glorot(k, shape):
        fan_in, fan_out = shape
        scale = jnp.sqrt(2.0 / (fan_in + fan_out))
        return scale * jax.random.normal(k, shape, dtype=jnp.float32)

    return {
        # online encoder (2-layer GCN)
        "w1o": glorot(ks[0], (in_dim, hid_dim)),
        "b1o": jnp.zeros((1, hid_dim), jnp.float32),
        "w2o": glorot(ks[1], (hid_dim, hid_dim)),
        "b2o": jnp.zeros((1, hid_dim), jnp.float32),
        # predictor MLP
        "wp1": glorot(ks[2], (hid_dim, pred_hid)),
        "bp1": jnp.zeros((1, pred_hid), jnp.float32),
        "wp2": glorot(ks[3], (pred_hid, hid_dim)),
        "bp2": jnp.zeros((1, hid_dim), jnp.float32),
        # target encoder: deepcopy + reset_parameters -> independent init
        "w1t": glorot(ks[4], (in_dim, hid_dim)),
        "b1t": jnp.zeros((1, hid_dim), jnp.float32),
        "w2t": glorot(ks[5], (hid_dim, hid_dim)),
        "b2t": jnp.zeros((1, hid_dim), jnp.float32),
    }


if __name__ == "__main__":
    key = jax.random.PRNGKey(0)
    k_x, k_params = jax.random.split(key)

    # 4 graphs of 128 nodes each -> N=512 gives a real (2, 2) tile grid at
    # 256x256 blocks, exercising both the k-reduction and pooled accumulation.
    N, F, HID, PRED_HID, B = 512, 16, 32, 64, 4

    x = jax.random.normal(k_x, (N, F), dtype=jnp.float32)
    per = N // B
    batch = jnp.repeat(jnp.arange(B, dtype=jnp.int32), per)          # [N]
    # deterministic edges: ring within each graph
    nodes = jnp.arange(N, dtype=jnp.int32)
    ring_dst = (nodes % per + 1) % per + (nodes // per) * per
    edge_index = jnp.stack([nodes, ring_dst])                        # [2, N]

    ptb_max, ptb_min = 0.3, 0.1     # data.max / data.min perturbation probs

    params = init_params(k_params, F, HID, PRED_HID)

    online_q, target_y = laplace_gnn_forward(
        params, x, edge_index, batch, B, ptb_max, ptb_min,
        block_rows=256, block_k=256)
    jax.block_until_ready((online_q, target_y))

    assert online_q.shape == (B, HID) and target_y.shape == (B, HID)
    assert bool(jnp.all(jnp.isfinite(online_q)))
    assert bool(jnp.all(jnp.isfinite(target_y)))
    assert float(jnp.max(jnp.abs(target_y))) > 0.0   # pooling actually ran
    print("KERNEL_OK")
</pallas_src>

<mosaic_0001>
module attributes {stable_mosaic.version = 11 : i64} {
  func.func @_propagate_kernel(%arg0: i32, %arg1: i32, %arg2: memref<256x256xbf16, #tpu.memory_space<vmem>>, %arg3: memref<512x128xbf16, #tpu.memory_space<vmem>>, %arg4: memref<128x256xbf16, #tpu.memory_space<vmem>>, %arg5: memref<1x256xf32, #tpu.memory_space<vmem>>, %arg6: memref<256x256xbf16, #tpu.memory_space<vmem>>, %arg7: memref<256x128xf32, #tpu.memory_space<vmem>>) attributes {dimension_semantics = [#tpu.dimension_semantics<parallel>, #tpu.dimension_semantics<arbitrary>], iteration_bounds = array<i64: 2, 2>, scalar_prefetch = 0 : i64, scratch_operands = 1 : i64, tpu.core_type = #tpu.core_type<tc>, window_params = [{transform_indices = @transform_0, window_bounds = array<i64: 256, 256>}, {pipeline_mode = #tpu.pipeline_mode<synchronous>, transform_indices = @transform_1, window_bounds = array<i64: 512, 128>}, {pipeline_mode = #tpu.pipeline_mode<synchronous>, transform_indices = @transform_2, window_bounds = array<i64: 128, 256>}, {pipeline_mode = #tpu.pipeline_mode<synchronous>, transform_indices = @transform_3, window_bounds = array<i64: 1, 256>}, {transform_indices = @transform_4, window_bounds = array<i64: 256, 256>}]} {
    %c0_i32 = arith.constant 0 : i32
    %0 = arith.cmpi eq, %arg1, %c0_i32 : i32
    %1 = arith.extui %0 : i1 to i32
    %c0_i32_0 = arith.constant 0 : i32
    %2 = arith.cmpi ne, %1, %c0_i32_0 : i32
    scf.if %2 {
      %cst_8 = arith.constant 0.000000e+00 : f32
      %15 = vector.broadcast %cst_8 : f32 to vector<256x128xf32>
      %c0_9 = arith.constant 0 : index
      %c0_10 = arith.constant 0 : index
      %16 = vector.load %arg7[%c0_9, %c0_10] : memref<256x128xf32, #tpu.memory_space<vmem>>, vector<256x128xf32>
      tpu.vector_store %arg7[%c0_9, %c0_10], %15 {strides = array<i32>} : memref<256x128xf32, #tpu.memory_space<vmem>>, vector<256x128xf32>,
    } else {
    }
    %c256_i32 = arith.constant 256 : i32
    %3 = arith.muli %arg1, %c256_i32 : i32
    %4 = tpu.assume_multiple %3, 256 : i32
    %5 = arith.index_cast %4 : i32 to index
    %c0 = arith.constant 0 : index
    %6 = vector.load %arg3[%5, %c0] : memref<512x128xbf16, #tpu.memory_space<vmem>>, vector<256x128xbf16>
    %c0_1 = arith.constant 0 : index
    %c0_2 = arith.constant 0 : index
    %7 = vector.load %arg7[%c0_1, %c0_2] : memref<256x128xf32, #tpu.memory_space<vmem>>, vector<256x128xf32>
    %c0_3 = arith.constant 0 : index
    %c0_4 = arith.constant 0 : index
    %8 = vector.load %arg2[%c0_3, %c0_4] : memref<256x256xbf16, #tpu.memory_space<vmem>>, vector<256x256xbf16>
    %cst = arith.constant dense<0.000000e+00> : vector<256x128xf32>
    %9 = tpu.matmul %8, %6, %cst {dimension_numbers = #tpu.dot_dimension_numbers<[1], [0], [0], [1], [0, 0, 1, 1], [], []>} : vector<256x256xbf16>, vector<256x128xbf16>, vector<256x128xf32> -> vector<256x128xf32>
    %10 = arith.addf %7, %9 : vector<256x128xf32>
    %c0_5 = arith.constant 0 : index
    %c0_6 = arith.constant 0 : index
    %11 = vector.load %arg7[%c0_5, %c0_6] : memref<256x128xf32, #tpu.memory_space<vmem>>, vector<256x128xf32>
    tpu.vector_store %arg7[%c0_5, %c0_6], %10 {strides = array<i32>} : memref<256x128xf32, #tpu.memory_space<vmem>>, vector<256x128xf32>,
    %c1_i32 = arith.constant 1 : i32
    %12 = arith.cmpi eq, %arg1, %c1_i32 : i32
    %13 = arith.extui %12 : i1 to i32
    %c0_i32_7 = arith.constant 0 : i32
    %14 = arith.cmpi ne, %13, %c0_i32_7 : i32
    scf.if %14 {
      %c0_8 = arith.constant 0 : index
      %c0_9 = arith.constant 0 : index
      %15 = vector.load %arg7[%c0_8, %c0_9] : memref<256x128xf32, #tpu.memory_space<vmem>>, vector<256x128xf32>
      %16 = arith.truncf %15 : vector<256x128xf32> to vector<256x128xbf16>
      %c0_10 = arith.constant 0 : index
      %c0_11 = arith.constant 0 : index
      %17 = vector.load %arg4[%c0_10, %c0_11] : memref<128x256xbf16, #tpu.memory_space<vmem>>, vector<128x256xbf16>
      %cst_12 = arith.constant dense<0.000000e+00> : vector<256x256xf32>
      %18 = tpu.matmul %16, %17, %cst_12 {dimension_numbers = #tpu.dot_dimension_numbers<[1], [0], [0], [1], [0, 0, 1, 1], [], []>} : vector<256x128xbf16>, vector<128x256xbf16>, vector<256x256xf32> -> vector<256x256xf32>
      %c0_13 = arith.constant 0 : index
      %c0_14 = arith.constant 0 : index
      %19 = vector.load %arg5[%c0_13, %c0_14] : memref<1x256xf32, #tpu.memory_space<vmem>>, vector<1x256xf32>
      %20 = vector.broadcast %19 : vector<1x256xf32> to vector<256x256xf32>
      %21 = arith.addf %18, %20 : vector<256x256xf32>
      %cst_15 = arith.constant 0.000000e+00 : f32
      %22 = vector.broadcast %cst_15 : f32 to vector<256x256xf32>
      %23 = arith.maximumf %21, %22 : vector<256x256xf32>
      %24 = arith.truncf %23 : vector<256x256xf32> to vector<256x256xbf16>
      %c0_16 = arith.constant 0 : index
      %c0_17 = arith.constant 0 : index
      %25 = vector.load %arg6[%c0_16, %c0_17] : memref<256x256xbf16, #tpu.memory_space<vmem>>, vector<256x256xbf16>
      tpu.vector_store %arg6[%c0_16, %c0_17], %24 {strides = array<i32>} : memref<256x256xbf16, #tpu.memory_space<vmem>>, vector<256x256xbf16>,
    } else {
    }
    return
  }
  func.func @transform_0(%arg0: i32, %arg1: i32) -> (i32, i32) {
    %c0_i32 = arith.constant 0 : i32
    return %arg0, %arg1 : i32, i32
  }
  func.func @transform_1(%arg0: i32, %arg1: i32) -> (i32, i32) {
    %c0_i32 = arith.constant 0 : i32
    %c0_i32_0 = arith.constant 0 : i32
    %c0_i32_1 = arith.constant 0 : i32
    return %c0_i32, %c0_i32_0 : i32, i32
  }
  func.func @transform_2(%arg0: i32, %arg1: i32) -> (i32, i32) {
    %c0_i32 = arith.constant 0 : i32
    %c0_i32_0 = arith.constant 0 : i32
    %c0_i32_1 = arith.constant 0 : i32
    return %c0_i32, %c0_i32_0 : i32, i32
  }
  func.func @transform_3(%arg0: i32, %arg1: i32) -> (i32, i32) {
    %c0_i32 = arith.constant 0 : i32
    %c0_i32_0 = arith.constant 0 : i32
    %c0_i32_1 = arith.constant 0 : i32
    return %c0_i32, %c0_i32_0 : i32, i32
  }
  func.func @transform_4(%arg0: i32, %arg1: i32) -> (i32, i32) {
    %c0_i32 = arith.constant 0 : i32
    %c0_i32_0 = arith.constant 0 : i32
    return %arg0, %c0_i32 : i32, i32
  }
}

</mosaic_0001>

<llo_original>
// kernel: tpu_custom_call.1
$region0: #{tpu_custom_call.1}
  #allocation0 [shape = 'u32[]', space=smem, size = 0x4, offset = 0x4, fixed_abs, tag = 'smem constant byte address 0x4 - core index']
  #allocation1 [shape = 'u32[72,128]{1,0:T(1,128)}', space=vmem, size = 0x9000, scoped, tag = 'internal scratch']
  #allocation2 [shape = 'f32[256,128]{1,0:T(8,128)}', space=vmem, size = 0x20000, scoped, tag = 'scratch operand']
  %s0 = inlined_call_operand.hbm [shape: bf16[512,512], index: 0, kind: input, shape index: {}]
  %s1 = inlined_call_operand.hbm [shape: bf16[512,128], index: 1, kind: input, shape index: {}]
  %s2 = inlined_call_operand.hbm [shape: bf16[128,256], index: 2, kind: input, shape index: {}]
  %s3 = inlined_call_operand.vmem [shape: f32[1,256], index: 3, kind: input, shape index: {}]
  %s4 = inlined_call_operand.hbm [shape: bf16[512,256], index: 4, kind: output, shape index: {}]
  %s5 = sld [smem:[#allocation0]]
  $region69: #{tpu_custom_call.1} parent=0
    _
  %s7 = ssub.s32 1, %s5
  %s8 = scalar_select 0, %s7, %s5
  $region1: #{tpu_custom_call.1} parent=0
    #allocation3 [shape = 'u8[262144]{0}', space=vmem, size = 0x40000, scoped, tag = 'input window, operand 0']
    #allocation4 [shape = 's32[2]{0}', space=sflag, size = 0x8, scoped, tag = 'scoped memory for tpu_custom_call.1']
    #allocation5 [shape = 's32[2]{0}', space=sflag, size = 0x8, scoped, tag = 'scoped memory for tpu_custom_call.1']
    #allocation6 [shape = 'u8[131072]{0}', space=vmem, size = 0x20000, scoped, tag = 'input window, operand 1, single buffered']
    #allocation7 [shape = 's32[1]{0}', space=sflag, size = 0x4, scoped, tag = 'scoped memory for tpu_custom_call.1']
    #allocation8 [shape = 'u8[65536]{0}', space=vmem, size = 0x10000, scoped, tag = 'input window, operand 2, single buffered']
    #allocation9 [shape = 'u8[262144]{0}', space=vmem, size = 0x40000, scoped, tag = 'output window, operand 0']
    %9 = vsyncpa [#allocation4], 0
    %s10 = scalar_lea.sflag [#allocation4], 1
    %11 = vsyncpa %s10, 0
    %12 = vsyncpa [#allocation7], 0
    %13 = vsyncpa [#allocation5], 0
    %s14 = scalar_lea.sflag [#allocation5], 1
    %15 = vsyncpa %s14, 0
    loop: start=0, step=1, limit=6
    $region2: #{tpu_custom_call.1} parent=1 // loop_pre_header
      _
    $region3: #{tpu_custom_call.1} parent=1 // loop_header
      %s17 = sphi 0, %s21
      %p18 = scmp.ge.s32.totalorder %s17, 6
      %s24 = sphi 0, %s36
      %s25 = sphi 0, %s32
      %s26 = sphi 0, %s24
      %s27 = sphi 0, %s25
      %s28 = sphi 0, %s26
      %s29 = sphi 0, %s27
      %s41 = sphi 0, %s43
      %s44 = sphi 0, %s41
      %s45 = sphi 0, %s44
      %s61 = sphi 0, %s45
      %s65 = sphi 0, %s65
      %s67 = sphi 0, %s65
      %s68 = sphi 0, %s67
      %s82 = sphi 0, %s68
      %s86 = sphi 0, %s86
      %s88 = sphi 0, %s86
      %s89 = sphi 0, %s88
      %s103 = sphi 0, %s89
      %s107 = sphi 0, %s107
      %s109 = sphi 0, %s107
      %s110 = sphi 0, %s109
      %s124 = sphi 0, %s110
      %s130 = sphi 0, %s132
      %s133 = sphi 0, %s130
      %s134 = sphi 0, %s133
      %s150 = sphi 0, %s134
    $region4: #{tpu_custom_call.1} parent=1 // loop_header_branch
      %20 = sbr.rel (%p18) target = $region8
    $region5: #{tpu_custom_call.1} parent=1 // loop_body
      %s22 = ssub.s32 %s17, 1
      %s23 = ssub.s32 %s17, 2
      %s30 = sadd.s32 1, %s25
      %p31 = scmp.ge.s32.totalorder %s30, 2
      %s32 = scalar_select %p31, 0, %s30
      %s33 = sadd.s32 1, %s24
      %s34 = scalar_select %p31, %s33, %s24
      %p35 = scmp.ge.s32.totalorder %s34, 2
      %s36 = scalar_select %p35, 0, %s34
      %s37 = ssub.s32 %s24, %s36
      %s38 = ssub.s32 %s25, %s32
      %s39 = sor.u32 %s37, %s38
      %p40 = scmp.eq.s32.totalorder %s39, 0
      %s42 = sadd.s32 %s41, 1
      %s43 = scalar_select %p40, %s41, %s42
      %p46 = pneg %p40
      %p47 = scmp.eq.s32.totalorder %s17, 3
      %p48 = por %p46, %p47
      %p49 = scmp.ne.s32.totalorder %s41, %s44
      %p50 = scmp.eq.s32.totalorder %s17, 0
      %p51 = por %p49, %p50
      %p52 = scmp.ne.s32.totalorder %s41, %s44
      %p53 = scmp.eq.s32.totalorder %s22, 3
      %p54 = por %p52, %p53
      %p55 = scmp.ne.s32.totalorder %s44, %s45
      %p56 = scmp.eq.s32.totalorder %s22, 0
      %p57 = por %p55, %p56
      %p58 = scmp.ne.s32.totalorder %s44, %s45
      %p59 = scmp.eq.s32.totalorder %s23, 3
      %p60 = por %p58, %p59
      %p62 = scmp.ne.s32.totalorder %s45, %s61
      %p63 = scmp.eq.s32.totalorder %s23, 0
      %p64 = por %p62, %p63
      %s66 = sadd.s32 %s65, 1
      %p69 = scmp.eq.s32.totalorder %s17, 3
      %p70 = scmp.ne.s32.totalorder %s65, %s67
      %p71 = scmp.eq.s32.totalorder %s17, 0
      %p72 = por %p70, %p71
      %p73 = scmp.ne.s32.totalorder %s65, %s67
      %p74 = scmp.eq.s32.totalorder %s22, 3
      %p75 = por %p73, %p74
      %p76 = scmp.ne.s32.totalorder %s67, %s68
      %p77 = scmp.eq.s32.totalorder %s22, 0
      %p78 = por %p76, %p77
      %p79 = scmp.ne.s32.totalorder %s67, %s68
      %p80 = scmp.eq.s32.totalorder %s23, 3
      %p81 = por %p79, %p80
      %p83 = scmp.ne.s32.totalorder %s68, %s82
      %p84 = scmp.eq.s32.totalorder %s23, 0
      %p85 = por %p83, %p84
      %s87 = sadd.s32 %s86, 1
      %p90 = scmp.eq.s32.totalorder %s17, 3
      %p91 = scmp.ne.s32.totalorder %s86, %s88
      %p92 = scmp.eq.s32.totalorder %s17, 0
      %p93 = por %p91, %p92
      %p94 = scmp.ne.s32.totalorder %s86, %s88
      %p95 = scmp.eq.s32.totalorder %s22, 3
      %p96 = por %p94, %p95
      %p97 = scmp.ne.s32.totalorder %s88, %s89
      %p98 = scmp.eq.s32.totalorder %s22, 0
      %p99 = por %p97, %p98
      %p100 = scmp.ne.s32.totalorder %s88, %s89
      %p101 = scmp.eq.s32.totalorder %s23, 3
      %p102 = por %p100, %p101
      %p104 = scmp.ne.s32.totalorder %s89, %s103
      %p105 = scmp.eq.s32.totalorder %s23, 0
      %p106 = por %p104, %p105
      %s108 = sadd.s32 %s107, 1
      %p111 = scmp.eq.s32.totalorder %s17, 3
      %p112 = scmp.ne.s32.totalorder %s107, %s109
      %p113 = scmp.eq.s32.totalorder %s17, 0
      %p114 = por %p112, %p113
      %p115 = scmp.ne.s32.totalorder %s107, %s109
      %p116 = scmp.eq.s32.totalorder %s22, 3
      %p117 = por %p115, %p116
      %p118 = scmp.ne.s32.totalorder %s109, %s110
      %p119 = scmp.eq.s32.totalorder %s22, 0
      %p120 = por %p118, %p119
      %p121 = scmp.ne.s32.totalorder %s109, %s110
      %p122 = scmp.eq.s32.totalorder %s23, 3
      %p123 = por %p121, %p122
      %p125 = scmp.ne.s32.totalorder %s110, %s124
      %p126 = scmp.eq.s32.totalorder %s23, 0
      %p127 = por %p125, %p126
      %s128 = ssub.s32 %s24, %s36
      %p129 = scmp.eq.s32.totalorder %s128, 0
      %s131 = sadd.s32 %s130, 1
      %s132 = scalar_select %p129, %s130, %s131
      %p135 = pneg %p129
      %p136 = scmp.eq.s32.totalorder %s17, 3
      %p137 = por %p135, %p136
      %p138 = scmp.ne.s32.totalorder %s130, %s133
      %p139 = scmp.eq.s32.totalorder %s17, 0
      %p140 = por %p138, %p139
      %p141 = scmp.ne.s32.totalorder %s130, %s133
      %p142 = scmp.eq.s32.totalorder %s22, 3
      %p143 = por %p141, %p142
      %p144 = scmp.ne.s32.totalorder %s133, %s134
      %p145 = scmp.eq.s32.totalorder %s22, 0
      %p146 = por %p144, %p145
      %p147 = scmp.ne.s32.totalorder %s133, %s134
      %p148 = scmp.eq.s32.totalorder %s23, 3
      %p149 = por %p147, %p148
      %p151 = scmp.ne.s32.totalorder %s134, %s150
      %p152 = scmp.eq.s32.totalorder %s23, 0
      %p153 = por %p151, %p152
      %p154 = scmp.le.s32.totalorder 1, %s17
      %p155 = scmp.lt.s32.totalorder %s17, 5
      %p156 = pnand %p154, %p155
      %p157 = pneg %p156
      // Predicated region
      $region9: #{tpu_custom_call.1} parent=5 // pred_check
        _
      $region10: #{tpu_custom_call.1} parent=5 // pred_check_branch
        %159 = sbr.rel (%p156) target = $region12
      $region11: #{tpu_custom_call.1} parent=5 // pred_region
        %s160 = ssub.s32 %s17, 1
        // Predicated region
        $region13: #{tpu_custom_call.1} parent=11 // pred_check
          %p161 = pneg %p78
        $region14: #{tpu_custom_call.1} parent=11 // pred_check_branch
          %163 = sbr.rel (%p161) target = $region16
        $region15: #{tpu_custom_call.1} parent=11 // pred_region
          %165 = vsyncadd [#allocation7], 0
          %s166 = sshll.u32 %s1, 4
          %s167 = int_to_ptr.hbm [resolvable:$true] %s166
          %s168 = sshll.u32 [#allocation6], 4
          %s169 = int_to_ptr.vmem [resolvable:$true] %s168
          %174 = dma.hbm_to_vmem [thread:$0]  %s167, 4096, %s169, [#allocation7], 64, 64, 4
        $region16: #{tpu_custom_call.1} parent=11 // pred_fallthru
          _
        // Predicated region
        $region17: #{tpu_custom_call.1} parent=11 // pred_check
          %p175 = pneg %p99
        $region18: #{tpu_custom_call.1} parent=11 // pred_check_branch
          %177 = sbr.rel (%p175) target = $region20
        $region19: #{tpu_custom_call.1} parent=11 // pred_region
          %179 = vsyncadd [#allocation7], 0
          %s180 = sshll.u32 %s2, 4
          %s181 = int_to_ptr.hbm [resolvable:$true] %s180
          %s182 = sshll.u32 [#allocation8], 4
          %s183 = int_to_ptr.vmem [resolvable:$true] %s182
          %188 = dma.hbm_to_vmem [thread:$0]  %s181, 2048, %s183, [#allocation7], 128, 128, 8
        $region20: #{tpu_custom_call.1} parent=11 // pred_fallthru
          _
        // Predicated region
        $region21: #{tpu_custom_call.1} parent=11 // pred_check
          %p189 = pneg %p120
        $region22: #{tpu_custom_call.1} parent=11 // pred_check_branch
          %191 = sbr.rel (%p189) target = $region24
        $region23: #{tpu_custom_call.1} parent=11 // pred_region
          _
        $region24: #{tpu_custom_call.1} parent=11 // pred_fallthru
          _
      $region12: #{tpu_custom_call.1} parent=5 // pred_fallthru
        _
      %p192 = scmp.lt.s32.totalorder %s17, 4
      // Predicated region
      $region25: #{tpu_custom_call.1} parent=5 // pred_check
        %p193 = pneg %p192
      $region26: #{tpu_custom_call.1} parent=5 // pred_check_branch
        %195 = sbr.rel (%p193) target = $region28
      $region27: #{tpu_custom_call.1} parent=5 // pred_region
        // Predicated region
        $region29: #{tpu_custom_call.1} parent=27 // pred_check
          %p196 = pneg %p51
        $region30: #{tpu_custom_call.1} parent=27 // pred_check_branch
          %198 = sbr.rel (%p196) target = $region32
        $region31: #{tpu_custom_call.1} parent=27 // pred_region
          %s199 = sand.u32 %s41, 1
          %s200 = scalar_lea.sflag [#allocation4], %s199
          %s201 = sand.u32 %s41, 1
          %s202 = smul.addr %s201, 256
          %s203 = scalar_lea.vmem [#allocation3], %s202
          %s204 = smul.u32 32, %s24
          %s205 = smul.u32 2, %s25
          %207 = vsyncadd %s200, 0
          %s208 = smul.addr %s204, 4
          %s209 = sadd.s32 %s205, %s208
          %s210 = smul.addr %s209, 4
          %s211 = scalar_lea.hbm %s0, %s210
          %s212 = sshll.u32 %s211, 4
          %s213 = int_to_ptr.hbm [resolvable:$true] %s212
          %s214 = sshll.u32 %s203, 4
          %s215 = int_to_ptr.vmem [resolvable:$true] %s214
          %220 = dma.hbm_to_vmem [thread:$0]  %s213, 4096, %s215, %s200, 256, 128, 8
        $region32: #{tpu_custom_call.1} parent=27 // pred_fallthru
          _
      $region28: #{tpu_custom_call.1} parent=5 // pred_fallthru
        _
      %p221 = scmp.le.s32.totalorder 1, %s17
      %p222 = scmp.lt.s32.totalorder %s17, 5
      %p223 = pnand %p221, %p222
      %p224 = pneg %p223
      // Predicated region
      $region33: #{tpu_custom_call.1} parent=5 // pred_check
        _
      $region34: #{tpu_custom_call.1} parent=5 // pred_check_branch
        %226 = sbr.rel (%p223) target = $region36
      $region35: #{tpu_custom_call.1} parent=5 // pred_region
        %s227 = ssub.s32 %s17, 1
        %s228 = sand.u32 %s44, 1
        %s229 = scalar_lea.sflag [#allocation4], %s228
        %s230 = sand.u32 %s44, 1
        %s231 = smul.addr %s230, 256
        %s232 = scalar_lea.vmem [#allocation3], %s231
        // Predicated region
        $region37: #{tpu_custom_call.1} parent=35 // pred_check
          %p233 = pneg %p57
        $region38: #{tpu_custom_call.1} parent=35 // pred_check_branch
          %235 = sbr.rel (%p233) target = $region40
        $region39: #{tpu_custom_call.1} parent=35 // pred_region
          %237 = dma.done %s229, 4096
        $region40: #{tpu_custom_call.1} parent=35 // pred_fallthru
          _
        // Predicated region
        $region41: #{tpu_custom_call.1} parent=35 // pred_check
          %p238 = pneg %p78
        $region42: #{tpu_custom_call.1} parent=35 // pred_check_branch
          %240 = sbr.rel (%p238) target = $region44
        $region43: #{tpu_custom_call.1} parent=35 // pred_region
          %242 = dma.done [#allocation7], 4096
        $region44: #{tpu_custom_call.1} parent=35 // pred_fallthru
          _
        // Predicated region
        $region45: #{tpu_custom_call.1} parent=35 // pred_check
          %p243 = pneg %p99
        $region46: #{tpu_custom_call.1} parent=35 // pred_check_branch
          %245 = sbr.rel (%p243) target = $region48
        $region47: #{tpu_custom_call.1} parent=35 // pred_region
          %247 = dma.done [#allocation7], 2048
        $region48: #{tpu_custom_call.1} parent=35 // pred_fallthru
          _
        %s248 = sand.u32 %s44, 1
        %s249 = scalar_lea.sflag [#allocation4], %s248
        %s250 = sand.u32 %s44, 1
        %s251 = smul.addr %s250, 256
        %s252 = scalar_lea.vmem [#allocation3], %s251
        %p253 = pneg %p57
        %p254 = pneg %p54
        %p255 = pneg %p78
        %p256 = pneg %p75
        %p257 = pneg %p99
        %p258 = pneg %p96
        %p259 = pneg %p120
        %p260 = pneg %p117
        %p261 = pneg %p146
        %p262 = pneg %p143
        %s263 = sand.u32 %s133, 1
        %s264 = scalar_lea.sflag [#allocation5], %s263
        %s265 = sand.u32 %s133, 1
        %s266 = smul.addr %s265, 256
        %s267 = scalar_lea.vmem [#allocation9], %s266
        %s268 = smul.u32 32, %s26
        %s269 = smul.u32 2, %s27
        %s270 = smul.u32 32, %s26
        %p271 = scmp.eq.s32.totalorder %s27, 0
        // Predicated region
        $region49: #{tpu_custom_call.1} parent=35 // pred_check
          %p272 = pneg %p271
        $region50: #{tpu_custom_call.1} parent=35 // pred_check_branch
          %274 = sbr.rel (%p272) target = $region52
        $region51: #{tpu_custom_call.1} parent=35 // pred_region
          %275 = vst [vmem:[#allocation2] sm:$0xff] 0.0
          %276 = vst [vmem:[#allocation2 + $0x8] sm:$0xff] 0.0
          %277 = vst [vmem:[#allocation2 + $0x10] sm:$0xff] 0.0
          %278 = vst [vmem:[#allocation2 + $0x18] sm:$0xff] 0.0
          %279 = vst [vmem:[#allocation2 + $0x20] sm:$0xff] 0.0
          %280 = vst [vmem:[#allocation2 + $0x28] sm:$0xff] 0.0
          %281 = vst [vmem:[#allocation2 + $0x30] sm:$0xff] 0.0
          %282 = vst [vmem:[#allocation2 + $0x38] sm:$0xff] 0.0
          %283 = vst [vmem:[#allocation2 + $0x40] sm:$0xff] 0.0
          %284 = vst [vmem:[#allocation2 + $0x48] sm:$0xff] 0.0
          %285 = vst [vmem:[#allocation2 + $0x50] sm:$0xff] 0.0
          %286 = vst [vmem:[#allocation2 + $0x58] sm:$0xff] 0.0
          %287 = vst [vmem:[#allocation2 + $0x60] sm:$0xff] 0.0
          %288 = vst [vmem:[#allocation2 + $0x68] sm:$0xff] 0.0
          %289 = vst [vmem:[#allocation2 + $0x70] sm:$0xff] 0.0
          %290 = vst [vmem:[#allocation2 + $0x78] sm:$0xff] 0.0
          %291 = vst [vmem:[#allocation2 + $0x80] sm:$0xff] 0.0
          %292 = vst [vmem:[#allocation2 + $0x88] sm:$0xff] 0.0
          %293 = vst [vmem:[#allocation2 + $0x90] sm:$0xff] 0.0
          %294 = vst [vmem:[#allocation2 + $0x98] sm:$0xff] 0.0
          %295 = vst [vmem:[#allocation2 + $0xa0] sm:$0xff] 0.0
          %296 = vst [vmem:[#allocation2 + $0xa8] sm:$0xff] 0.0
          %297 = vst [vmem:[#allocation2 + $0xb0] sm:$0xff] 0.0
          %298 = vst [vmem:[#allocation2 + $0xb8] sm:$0xff] 0.0
          %299 = vst [vmem:[#allocation2 + $0xc0] sm:$0xff] 0.0
          %300 = vst [vmem:[#allocation2 + $0xc8] sm:$0xff] 0.0
          %301 = vst [vmem:[#allocation2 + $0xd0] sm:$0xff] 0.0
          %302 = vst [vmem:[#allocation2 + $0xd8] sm:$0xff] 0.0
          %303 = vst [vmem:[#allocation2 + $0xe0] sm:$0xff] 0.0
          %304 = vst [vmem:[#allocation2 + $0xe8] sm:$0xff] 0.0
          %305 = vst [vmem:[#allocation2 + $0xf0] sm:$0xff] 0.0
          %306 = vst [vmem:[#allocation2 + $0xf8] sm:$0xff] 0.0
        $region52: #{tpu_custom_call.1} parent=35 // pred_fallthru
          _
        %s307 = smul.u32 %s27, 256
        %s308 = sshra.s32 %s307, 3
        %s309 = sand.u32 %s307, 7
        %s310 = smul.addr %s308, 4
        %s311 = scalar_lea.vmem [#allocation6], %s310
        %v312 = vld [vmem:[%s311] sm:$0xf]
        %v313 = vld [vmem:[%s311 + $0x4] sm:$0xf]
        %v314 = vld [vmem:[%s311 + $0x8] sm:$0xf]
        %v315 = vld [vmem:[%s311 + $0xc] sm:$0xf]
        %v316 = vld [vmem:[%s311 + $0x10] sm:$0xf]
        %v317 = vld [vmem:[%s311 + $0x14] sm:$0xf]
        %v318 = vld [vmem:[%s311 + $0x18] sm:$0xf]
        %v319 = vld [vmem:[%s311 + $0x1c] sm:$0xf]
        %v320 = vld [vmem:[%s311 + $0x20] sm:$0xf]
        %v321 = vld [vmem:[%s311 + $0x24] sm:$0xf]
        %v322 = vld [vmem:[%s311 + $0x28] sm:$0xf]
        %v323 = vld [vmem:[%s311 + $0x2c] sm:$0xf]
        %v324 = vld [vmem:[%s311 + $0x30] sm:$0xf]
        %v325 = vld [vmem:[%s311 + $0x34] sm:$0xf]
        %v326 = vld [vmem:[%s311 + $0x38] sm:$0xf]
        %v327 = vld [vmem:[%s311 + $0x3c] sm:$0xf]
        %v328 = vld [vmem:[%s311 + $0x40] sm:$0xf]
        %v329 = vld [vmem:[%s311 + $0x44] sm:$0xf]
        %v330 = vld [vmem:[%s311 + $0x48] sm:$0xf]
        %v331 = vld [vmem:[%s311 + $0x4c] sm:$0xf]
        %v332 = vld [vmem:[%s311 + $0x50] sm:$0xf]
        %v333 = vld [vmem:[%s311 + $0x54] sm:$0xf]
        %v334 = vld [vmem:[%s311 + $0x58] sm:$0xf]
        %v335 = vld [vmem:[%s311 + $0x5c] sm:$0xf]
        %v336 = vld [vmem:[%s311 + $0x60] sm:$0xf]
        %v337 = vld [vmem:[%s311 + $0x64] sm:$0xf]
        %v338 = vld [vmem:[%s311 + $0x68] sm:$0xf]
        %v339 = vld [vmem:[%s311 + $0x6c] sm:$0xf]
        %v340 = vld [vmem:[%s311 + $0x70] sm:$0xf]
        %v341 = vld [vmem:[%s311 + $0x74] sm:$0xf]
        %v342 = vld [vmem:[%s311 + $0x78] sm:$0xf]
        %v343 = vld [vmem:[%s311 + $0x7c] sm:$0xf]
        %v344 = vld [vmem:[#allocation2] sm:$0xff]
        %v345 = vld [vmem:[#allocation2 + $0x8] sm:$0xff]
        %v346 = vld [vmem:[#allocation2 + $0x10] sm:$0xff]
        %v347 = vld [vmem:[#allocation2 + $0x18] sm:$0xff]
        %v348 = vld [vmem:[#allocation2 + $0x20] sm:$0xff]
        %v349 = vld [vmem:[#allocation2 + $0x28] sm:$0xff]
        %v350 = vld [vmem:[#allocation2 + $0x30] sm:$0xff]
        %v351 = vld [vmem:[#allocation2 + $0x38] sm:$0xff]
        %v352 = vld [vmem:[#allocation2 + $0x40] sm:$0xff]
        %v353 = vld [vmem:[#allocation2 + $0x48] sm:$0xff]
        %v354 = vld [vmem:[#allocation2 + $0x50] sm:$0xff]
        %v355 = vld [vmem:[#allocation2 + $0x58] sm:$0xff]
        %v356 = vld [vmem:[#allocation2 + $0x60] sm:$0xff]
        %v357 = vld [vmem:[#allocation2 + $0x68] sm:$0xff]
        %v358 = vld [vmem:[#allocation2 + $0x70] sm:$0xff]
        %v359 = vld [vmem:[#allocation2 + $0x78] sm:$0xff]
        %v360 = vld [vmem:[#allocation2 + $0x80] sm:$0xff]
        %v361 = vld [vmem:[#allocation2 + $0x88] sm:$0xff]
        %v362 = vld [vmem:[#allocation2 + $0x90] sm:$0xff]
        %v363 = vld [vmem:[#allocation2 + $0x98] sm:$0xff]
        %v364 = vld [vmem:[#allocation2 + $0xa0] sm:$0xff]
        %v365 = vld [vmem:[#allocation2 + $0xa8] sm:$0xff]
        %v366 = vld [vmem:[#allocation2 + $0xb0] sm:$0xff]
        %v367 = vld [vmem:[#allocation2 + $0xb8] sm:$0xff]
        %v368 = vld [vmem:[#allocation2 + $0xc0] sm:$0xff]
        %v369 = vld [vmem:[#allocation2 + $0xc8] sm:$0xff]
        %v370 = vld [vmem:[#allocation2 + $0xd0] sm:$0xff]
        %v371 = vld [vmem:[#allocation2 + $0xd8] sm:$0xff]
        %v372 = vld [vmem:[#allocation2 + $0xe0] sm:$0xff]
        %v373 = vld [vmem:[#allocation2 + $0xe8] sm:$0xff]
        %v374 = vld [vmem:[#allocation2 + $0xf0] sm:$0xff]
        %v375 = vld [vmem:[#allocation2 + $0xf8] sm:$0xff]
        %v376 = vld [vmem:[%s232] sm:$0xff]
        %v377 = vld [vmem:[%s232 + $0x8] sm:$0xff]
        %v378 = vld [vmem:[%s232 + $0x10] sm:$0xff]
        %v379 = vld [vmem:[%s232 + $0x18] sm:$0xff]
        %v380 = vld [vmem:[%s232 + $0x20] sm:$0xff]
        %v381 = vld [vmem:[%s232 + $0x28] sm:$0xff]
        %v382 = vld [vmem:[%s232 + $0x30] sm:$0xff]
        %v383 = vld [vmem:[%s232 + $0x38] sm:$0xff]
        %v384 = vld [vmem:[%s232 + $0x40] sm:$0xff]
        %v385 = vld [vmem:[%s232 + $0x48] sm:$0xff]
        %v386 = vld [vmem:[%s232 + $0x50] sm:$0xff]
        %v387 = vld [vmem:[%s232 + $0x58] sm:$0xff]
        %v388 = vld [vmem:[%s232 + $0x60] sm:$0xff]
        %v389 = vld [vmem:[%s232 + $0x68] sm:$0xff]
        %v390 = vld [vmem:[%s232 + $0x70] sm:$0xff]
        %v391 = vld [vmem:[%s232 + $0x78] sm:$0xff]
        %v392 = vld [vmem:[%s232 + $0x80] sm:$0xff]
        %v393 = vld [vmem:[%s232 + $0x88] sm:$0xff]
        %v394 = vld [vmem:[%s232 + $0x90] sm:$0xff]
        %v395 = vld [vmem:[%s232 + $0x98] sm:$0xff]
        %v396 = vld [vmem:[%s232 + $0xa0] sm:$0xff]
        %v397 = vld [vmem:[%s232 + $0xa8] sm:$0xff]
        %v398 = vld [vmem:[%s232 + $0xb0] sm:$0xff]
        %v399 = vld [vmem:[%s232 + $0xb8] sm:$0xff]
        %v400 = vld [vmem:[%s232 + $0xc0] sm:$0xff]
        %v401 = vld [vmem:[%s232 + $0xc8] sm:$0xff]
        %v402 = vld [vmem:[%s232 + $0xd0] sm:$0xff]
        %v403 = vld [vmem:[%s232 + $0xd8] sm:$0xff]
        %v404 = vld [vmem:[%s232 + $0xe0] sm:$0xff]
        %v405 = vld [vmem:[%s232 + $0xe8] sm:$0xff]
        %v406 = vld [vmem:[%s232 + $0xf0] sm:$0xff]
        %v407 = vld [vmem:[%s232 + $0xf8] sm:$0xff]
        %v440 = vunpack.c.l.b16 %v376
        %v441 = vunpack.c.h.b16 %v376
        %v442 = vunpack.c.l.b16 %v377
        %v443 = vunpack.c.h.b16 %v377
        %v444 = vunpack.c.l.b16 %v378
        %v445 = vunpack.c.h.b16 %v378
        %v446 = vunpack.c.l.b16 %v379
        %v447 = vunpack.c.h.b16 %v379
        %v448 = vunpack.c.l.b16 %v380
        %v449 = vunpack.c.h.b16 %v380
        %v450 = vunpack.c.l.b16 %v381
        %v451 = vunpack.c.h.b16 %v381
        %v452 = vunpack.c.l.b16 %v382
        %v453 = vunpack.c.h.b16 %v382
        %v454 = vunpack.c.l.b16 %v383
        %v455 = vunpack.c.h.b16 %v383
        %v456 = vunpack.c.l.b16 %v384
        %v457 = vunpack.c.h.b16 %v384
        %v458 = vunpack.c.l.b16 %v385
        %v459 = vunpack.c.h.b16 %v385
        %v460 = vunpack.c.l.b16 %v386
        %v461 = vunpack.c.h.b16 %v386
        %v462 = vunpack.c.l.b16 %v387
        %v463 = vunpack.c.h.b16 %v387
        %v464 = vunpack.c.l.b16 %v388
        %v465 = vunpack.c.h.b16 %v388
        %v466 = vunpack.c.l.b16 %v389
        %v467 = vunpack.c.h.b16 %v389
        %v468 = vunpack.c.l.b16 %v390
        %v469 = vunpack.c.h.b16 %v390
        %v470 = vunpack.c.l.b16 %v391
        %v471 = vunpack.c.h.b16 %v391
        %v472 = vunpack.c.l.b16 %v392
        %v473 = vunpack.c.h.b16 %v392
        %v474 = vunpack.c.l.b16 %v393
        %v475 = vunpack.c.h.b16 %v393
        %v476 = vunpack.c.l.b16 %v394
        %v477 = vunpack.c.h.b16 %v394
        %v478 = vunpack.c.l.b16 %v395
        %v479 = vunpack.c.h.b16 %v395
        %v480 = vunpack.c.l.b16 %v396
        %v481 = vunpack.c.h.b16 %v396
        %v482 = vunpack.c.l.b16 %v397
        %v483 = vunpack.c.h.b16 %v397
        %v484 = vunpack.c.l.b16 %v398
        %v485 = vunpack.c.h.b16 %v398
        %v486 = vunpack.c.l.b16 %v399
        %v487 = vunpack.c.h.b16 %v399
        %v488 = vunpack.c.l.b16 %v400
        %v489 = vunpack.c.h.b16 %v400
        %v490 = vunpack.c.l.b16 %v401
        %v491 = vunpack.c.h.b16 %v401
        %v492 = vunpack.c.l.b16 %v402
        %v493 = vunpack.c.h.b16 %v402
        %v494 = vunpack.c.l.b16 %v403
        %v495 = vunpack.c.h.b16 %v403
        %v496 = vunpack.c.l.b16 %v404
        %v497 = vunpack.c.h.b16 %v404
        %v498 = vunpack.c.l.b16 %v405
        %v499 = vunpack.c.h.b16 %v405
        %v500 = vunpack.c.l.b16 %v406
        %v501 = vunpack.c.h.b16 %v406
        %v502 = vunpack.c.l.b16 %v407
        %v503 = vunpack.c.h.b16 %v407
        %v504 = vpack.c.b16 %v442, %v440
        %v505 = vpack.c.b16 %v443, %v441
        %v506 = vpack.c.b16 %v446, %v444
        %v507 = vpack.c.b16 %v447, %v445
        %v508 = vpack.c.b16 %v450, %v448
        %v509 = vpack.c.b16 %v451, %v449
        %v510 = vpack.c.b16 %v454, %v452
        %v511 = vpack.c.b16 %v455, %v453
        %v512 = vpack.c.b16 %v458, %v456
        %v513 = vpack.c.b16 %v459, %v457
        %v514 = vpack.c.b16 %v462, %v460
        %v515 = vpack.c.b16 %v463, %v461
        %v516 = vpack.c.b16 %v466, %v464
        %v517 = vpack.c.b16 %v467, %v465
        %v518 = vpack.c.b16 %v470, %v468
        %v519 = vpack.c.b16 %v471, %v469
        %v520 = vpack.c.b16 %v474, %v472
        %v521 = vpack.c.b16 %v475, %v473
        %v522 = vpack.c.b16 %v478, %v476
        %v523 = vpack.c.b16 %v479, %v477
        %v524 = vpack.c.b16 %v482, %v480
        %v525 = vpack.c.b16 %v483, %v481
        %v526 = vpack.c.b16 %v486, %v484
        %v527 = vpack.c.b16 %v487, %v485
        %v528 = vpack.c.b16 %v490, %v488
        %v529 = vpack.c.b16 %v491, %v489
        %v530 = vpack.c.b16 %v494, %v492
        %v531 = vpack.c.b16 %v495, %v493
        %v532 = vpack.c.b16 %v498, %v496
        %v533 = vpack.c.b16 %v499, %v497
        %v534 = vpack.c.b16 %v502, %v500
        %v535 = vpack.c.b16 %v503, %v501
        %v600 = vunpack.c.l.b16 %v312
        %v601 = vunpack.c.l.b16 %v313
        %v602 = vunpack.c.l.b16 %v314
        %v603 = vunpack.c.l.b16 %v315
        %v604 = vunpack.c.l.b16 %v316
        %v605 = vunpack.c.l.b16 %v317
        %v606 = vunpack.c.l.b16 %v318
        %v607 = vunpack.c.l.b16 %v319
        %v608 = vunpack.c.l.b16 %v320
        %v609 = vunpack.c.l.b16 %v321
        %v610 = vunpack.c.l.b16 %v322
        %v611 = vunpack.c.l.b16 %v323
        %v612 = vunpack.c.l.b16 %v324
        %v613 = vunpack.c.l.b16 %v325
        %v614 = vunpack.c.l.b16 %v326
        %v615 = vunpack.c.l.b16 %v327
        %v616 = vunpack.c.l.b16 %v328
        %v617 = vunpack.c.l.b16 %v329
        %v618 = vunpack.c.l.b16 %v330
        %v619 = vunpack.c.l.b16 %v331
        %v620 = vunpack.c.l.b16 %v332
        %v621 = vunpack.c.l.b16 %v333
        %v622 = vunpack.c.l.b16 %v334
        %v623 = vunpack.c.l.b16 %v335
        %v624 = vunpack.c.l.b16 %v336
        %v625 = vunpack.c.l.b16 %v337
        %v626 = vunpack.c.l.b16 %v338
        %v627 = vunpack.c.l.b16 %v339
        %v628 = vunpack.c.l.b16 %v340
        %v629 = vunpack.c.l.b16 %v341
        %v630 = vunpack.c.l.b16 %v342
        %v631 = vunpack.c.l.b16 %v343
        %v632 = vpack.c.b16 %v601, %v600
        %v633 = vpack.c.b16 %v603, %v602
        %v634 = vpack.c.b16 %v605, %v604
        %v635 = vpack.c.b16 %v607, %v606
        %v636 = vpack.c.b16 %v609, %v608
        %v637 = vpack.c.b16 %v611, %v610
        %v638 = vpack.c.b16 %v613, %v612
        %v639 = vpack.c.b16 %v615, %v614
        %v640 = vpack.c.b16 %v617, %v616
        %v641 = vpack.c.b16 %v619, %v618
        %v642 = vpack.c.b16 %v621, %v620
        %v643 = vpack.c.b16 %v623, %v622
        %v644 = vpack.c.b16 %v625, %v624
        %v645 = vpack.c.b16 %v627, %v626
        %v646 = vpack.c.b16 %v629, %v628
        %v647 = vpack.c.b16 %v631, %v630
        %664 = vmatpush.bf16.msra.mxu0 %v639
        %665 = vmatpush.bf16.msra.mxu0 %v638
        %666 = vmatpush.bf16.msra.mxu0 %v637
        %667 = vmatpush.bf16.msra.mxu0 %v636
        %668 = vmatpush.bf16.msra.mxu0 %v635
        %669 = vmatpush.bf16.msra.mxu0 %v634
        %670 = vmatpush.bf16.msra.mxu0 %v633
        %671 = vmatpush.bf16.msra.mxu0 %v632
        %672 = vmatmul.bf16.gmra.mxu0 %v504
        %v673 = vpop.f32.mrf.mxu0
        %v674 = vadd.f32 0.0, %v673
        %v675 = vpop.f32.mrf.mxu0
        %v676 = vadd.f32 0.0, %v675
        %677 = vmatmul.bf16.gmra.mxu0 %v506
        %v678 = vpop.f32.mrf.mxu0
        %v679 = vadd.f32 0.0, %v678
        %v680 = vpop.f32.mrf.mxu0
        %v681 = vadd.f32 0.0, %v680
        %682 = vmatmul.bf16.gmra.mxu0 %v508
        %v683 = vpop.f32.mrf.mxu0
        %v684 = vadd.f32 0.0, %v683
        %v685 = vpop.f32.mrf.mxu0
        %v686 = vadd.f32 0.0, %v685
        %687 = vmatmul.bf16.gmra.mxu0 %v510
        %v688 = vpop.f32.mrf.mxu0
        %v689 = vadd.f32 0.0, %v688
        %v690 = vpop.f32.mrf.mxu0
        %v691 = vadd.f32 0.0, %v690
        %692 = vmatmul.bf16.gmra.mxu0 %v512
        %v693 = vpop.f32.mrf.mxu0
        %v694 = vadd.f32 0.0, %v693
        %v695 = vpop.f32.mrf.mxu0
        %v696 = vadd.f32 0.0, %v695
        %697 = vmatmul.bf16.gmra.mxu0 %v514
        %v698 = vpop.f32.mrf.mxu0
        %v699 = vadd.f32 0.0, %v698
        %v700 = vpop.f32.mrf.mxu0
        %v701 = vadd.f32 0.0, %v700
        %702 = vmatmul.bf16.gmra.mxu0 %v516
        %v703 = vpop.f32.mrf.mxu0
        %v704 = vadd.f32 0.0, %v703
        %v705 = vpop.f32.mrf.mxu0
        %v706 = vadd.f32 0.0, %v705
        %707 = vmatmul.bf16.gmra.mxu0 %v518
        %v708 = vpop.f32.mrf.mxu0
        %v709 = vadd.f32 0.0, %v708
        %v710 = vpop.f32.mrf.mxu0
        %v711 = vadd.f32 0.0, %v710
        %712 = vmatmul.bf16.gmra.mxu0 %v520
        %v713 = vpop.f32.mrf.mxu0
        %v714 = vadd.f32 0.0, %v713
        %v715 = vpop.f32.mrf.mxu0
        %v716 = vadd.f32 0.0, %v715
        %717 = vmatmul.bf16.gmra.mxu0 %v522
        %v718 = vpop.f32.mrf.mxu0
        %v719 = vadd.f32 0.0, %v718
        %v720 = vpop.f32.mrf.mxu0
        %v721 = vadd.f32 0.0, %v720
        %722 = vmatmul.bf16.gmra.mxu0 %v524
        %v723 = vpop.f32.mrf.mxu0
        %v724 = vadd.f32 0.0, %v723
        %v725 = vpop.f32.mrf.mxu0
        %v726 = vadd.f32 0.0, %v725
        %727 = vmatmul.bf16.gmra.mxu0 %v526
        %v728 = vpop.f32.mrf.mxu0
        %v729 = vadd.f32 0.0, %v728
        %v730 = vpop.f32.mrf.mxu0
        %v731 = vadd.f32 0.0, %v730
        %732 = vmatmul.bf16.gmra.mxu0 %v528
        %v733 = vpop.f32.mrf.mxu0
        %v734 = vadd.f32 0.0, %v733
        %v735 = vpop.f32.mrf.mxu0
        %v736 = vadd.f32 0.0, %v735
        %737 = vmatmul.bf16.gmra.mxu0 %v530
        %v738 = vpop.f32.mrf.mxu0
        %v739 = vadd.f32 0.0, %v738
        %v740 = vpop.f32.mrf.mxu0
        %v741 = vadd.f32 0.0, %v740
        %742 = vmatmul.bf16.gmra.mxu0 %v532
        %v743 = vpop.f32.mrf.mxu0
        %v744 = vadd.f32 0.0, %v743
        %v745 = vpop.f32.mrf.mxu0
        %v746 = vadd.f32 0.0, %v745
        %747 = vmatmul.bf16.gmra.mxu0 %v534
        %v748 = vpop.f32.mrf.mxu0
        %v749 = vadd.f32 0.0, %v748
        %v750 = vpop.f32.mrf.mxu0
        %v751 = vadd.f32 0.0, %v750
        %752 = vdwg.mxu0
        %753 = vmatpush.bf16.msra.mxu0 %v647
        %754 = vmatpush.bf16.msra.mxu0 %v646
        %755 = vmatpush.bf16.msra.mxu0 %v645
        %756 = vmatpush.bf16.msra.mxu0 %v644
        %757 = vmatpush.bf16.msra.mxu0 %v643
        %758 = vmatpush.bf16.msra.mxu0 %v642
        %759 = vmatpush.bf16.msra.mxu0 %v641
        %760 = vmatpush.bf16.msra.mxu0 %v640
        %761 = vmatmul.bf16.gmra.mxu0 %v505
        %v762 = vpop.f32.mrf.mxu0
        %v763 = vadd.f32 %v674, %v762
        %v764 = vpop.f32.mrf.mxu0
        %v765 = vadd.f32 %v676, %v764
        %766 = vmatmul.bf16.gmra.mxu0 %v507
        %v767 = vpop.f32.mrf.mxu0
        %v768 = vadd.f32 %v679, %v767
        %v769 = vpop.f32.mrf.mxu0
        %v770 = vadd.f32 %v681, %v769
        %771 = vmatmul.bf16.gmra.mxu0 %v509
        %v772 = vpop.f32.mrf.mxu0
        %v773 = vadd.f32 %v684, %v772
        %v774 = vpop.f32.mrf.mxu0
        %v775 = vadd.f32 %v686, %v774
        %776 = vmatmul.bf16.gmra.mxu0 %v511
        %v777 = vpop.f32.mrf.mxu0
        %v778 = vadd.f32 %v689, %v777
        %v779 = vpop.f32.mrf.mxu0
        %v780 = vadd.f32 %v691, %v779
        %781 = vmatmul.bf16.gmra.mxu0 %v513
        %v782 = vpop.f32.mrf.mxu0
        %v783 = vadd.f32 %v694, %v782
        %v784 = vpop.f32.mrf.mxu0
        %v785 = vadd.f32 %v696, %v784
        %786 = vmatmul.bf16.gmra.mxu0 %v515
        %v787 = vpop.f32.mrf.mxu0
        %v788 = vadd.f32 %v699, %v787
        %v789 = vpop.f32.mrf.mxu0
        %v790 = vadd.f32 %v701, %v789
        %791 = vmatmul.bf16.gmra.mxu0 %v517
        %v792 = vpop.f32.mrf.mxu0
        %v793 = vadd.f32 %v704, %v792
        %v794 = vpop.f32.mrf.mxu0
        %v795 = vadd.f32 %v706, %v794
        %796 = vmatmul.bf16.gmra.mxu0 %v519
        %v797 = vpop.f32.mrf.mxu0
        %v798 = vadd.f32 %v709, %v797
        %v799 = vpop.f32.mrf.mxu0
        %v800 = vadd.f32 %v711, %v799
        %801 = vmatmul.bf16.gmra.mxu0 %v521
        %v802 = vpop.f32.mrf.mxu0
        %v803 = vadd.f32 %v714, %v802
        %v804 = vpop.f32.mrf.mxu0
        %v805 = vadd.f32 %v716, %v804
        %806 = vmatmul.bf16.gmra.mxu0 %v523
        %v807 = vpop.f32.mrf.mxu0
        %v808 = vadd.f32 %v719, %v807
        %v809 = vpop.f32.mrf.mxu0
        %v810 = vadd.f32 %v721, %v809
        %811 = vmatmul.bf16.gmra.mxu0 %v525
        %v812 = vpop.f32.mrf.mxu0
        %v813 = vadd.f32 %v724, %v812
        %v814 = vpop.f32.mrf.mxu0
        %v815 = vadd.f32 %v726, %v814
        %816 = vmatmul.bf16.gmra.mxu0 %v527
        %v817 = vpop.f32.mrf.mxu0
        %v818 = vadd.f32 %v729, %v817
        %v819 = vpop.f32.mrf.mxu0
        %v820 = vadd.f32 %v731, %v819
        %821 = vmatmul.bf16.gmra.mxu0 %v529
        %v822 = vpop.f32.mrf.mxu0
        %v823 = vadd.f32 %v734, %v822
        %v824 = vpop.f32.mrf.mxu0
        %v825 = vadd.f32 %v736, %v824
        %826 = vmatmul.bf16.gmra.mxu0 %v531
        %v827 = vpop.f32.mrf.mxu0
        %v828 = vadd.f32 %v739, %v827
        %v829 = vpop.f32.mrf.mxu0
        %v830 = vadd.f32 %v741, %v829
        %831 = vmatmul.bf16.gmra.mxu0 %v533
        %v832 = vpop.f32.mrf.mxu0
        %v833 = vadd.f32 %v744, %v832
        %v834 = vpop.f32.mrf.mxu0
        %v835 = vadd.f32 %v746, %v834
        %836 = vmatmul.bf16.gmra.mxu0 %v535
        %v837 = vpop.f32.mrf.mxu0
        %v838 = vadd.f32 %v749, %v837
        %v839 = vpop.f32.mrf.mxu0
        %v840 = vadd.f32 %v751, %v839
        %841 = vdwg.mxu0
        %v842 = vadd.f32 %v344, %v763
        %v843 = vadd.f32 %v345, %v765
        %v844 = vadd.f32 %v346, %v768
        %v845 = vadd.f32 %v347, %v770
        %v846 = vadd.f32 %v348, %v773
        %v847 = vadd.f32 %v349, %v775
        %v848 = vadd.f32 %v350, %v778
        %v849 = vadd.f32 %v351, %v780
        %v850 = vadd.f32 %v352, %v783
        %v851 = vadd.f32 %v353, %v785
        %v852 = vadd.f32 %v354, %v788
        %v853 = vadd.f32 %v355, %v790
        %v854 = vadd.f32 %v356, %v793
        %v855 = vadd.f32 %v357, %v795
        %v856 = vadd.f32 %v358, %v798
        %v857 = vadd.f32 %v359, %v800
        %v858 = vadd.f32 %v360, %v803
        %v859 = vadd.f32 %v361, %v805
        %v860 = vadd.f32 %v362, %v808
        %v861 = vadd.f32 %v363, %v810
        %v862 = vadd.f32 %v364, %v813
        %v863 = vadd.f32 %v365, %v815
        %v864 = vadd.f32 %v366, %v818
        %v865 = vadd.f32 %v367, %v820
        %v866 = vadd.f32 %v368, %v823
        %v867 = vadd.f32 %v369, %v825
        %v868 = vadd.f32 %v370, %v828
        %v869 = vadd.f32 %v371, %v830
        %v870 = vadd.f32 %v372, %v833
        %v871 = vadd.f32 %v373, %v835
        %v872 = vadd.f32 %v374, %v838
        %v873 = vadd.f32 %v375, %v840
        %874 = vst [vmem:[#allocation2] sm:$0xff] %v842
        %875 = vst [vmem:[#allocation2 + $0x8] sm:$0xff] %v843
        %876 = vst [vmem:[#allocation2 + $0x10] sm:$0xff] %v844
        %877 = vst [vmem:[#allocation2 + $0x18] sm:$0xff] %v845
        %878 = vst [vmem:[#allocation2 + $0x20] sm:$0xff] %v846
        %879 = vst [vmem:[#allocation2 + $0x28] sm:$0xff] %v847
        %880 = vst [vmem:[#allocation2 + $0x30] sm:$0xff] %v848
        %881 = vst [vmem:[#allocation2 + $0x38] sm:$0xff] %v849
        %882 = vst [vmem:[#allocation2 + $0x40] sm:$0xff] %v850
        %883 = vst [vmem:[#allocation2 + $0x48] sm:$0xff] %v851
        %884 = vst [vmem:[#allocation2 + $0x50] sm:$0xff] %v852
        %885 = vst [vmem:[#allocation2 + $0x58] sm:$0xff] %v853
        %886 = vst [vmem:[#allocation2 + $0x60] sm:$0xff] %v854
        %887 = vst [vmem:[#allocation2 + $0x68] sm:$0xff] %v855
        %888 = vst [vmem:[#allocation2 + $0x70] sm:$0xff] %v856
        %889 = vst [vmem:[#allocation2 + $0x78] sm:$0xff] %v857
        %890 = vst [vmem:[#allocation2 + $0x80] sm:$0xff] %v858
        %891 = vst [vmem:[#allocation2 + $0x88] sm:$0xff] %v859
        %892 = vst [vmem:[#allocation2 + $0x90] sm:$0xff] %v860
        %893 = vst [vmem:[#allocation2 + $0x98] sm:$0xff] %v861
        %894 = vst [vmem:[#allocation2 + $0xa0] sm:$0xff] %v862
        %895 = vst [vmem:[#allocation2 + $0xa8] sm:$0xff] %v863
        %896 = vst [vmem:[#allocation2 + $0xb0] sm:$0xff] %v864
        %897 = vst [vmem:[#allocation2 + $0xb8] sm:$0xff] %v865
        %898 = vst [vmem:[#allocation2 + $0xc0] sm:$0xff] %v866
        %899 = vst [vmem:[#allocation2 + $0xc8] sm:$0xff] %v867
        %900 = vst [vmem:[#allocation2 + $0xd0] sm:$0xff] %v868
        %901 = vst [vmem:[#allocation2 + $0xd8] sm:$0xff] %v869
        %902 = vst [vmem:[#allocation2 + $0xe0] sm:$0xff] %v870
        %903 = vst [vmem:[#allocation2 + $0xe8] sm:$0xff] %v871
        %904 = vst [vmem:[#allocation2 + $0xf0] sm:$0xff] %v872
        %905 = vst [vmem:[#allocation2 + $0xf8] sm:$0xff] %v873
        %p906 = scmp.eq.s32.totalorder %s27, 1
        // Predicated region
        $region53: #{tpu_custom_call.1} parent=35 // pred_check
          %p907 = pneg %p906
        $region54: #{tpu_custom_call.1} parent=35 // pred_check_branch
          %909 = sbr.rel (%p907) target = $region56
        $region55: #{tpu_custom_call.1} parent=35 // pred_region
          %v910 = vld [vmem:[#allocation2] sm:$0xff]
          %v911 = vld [vmem:[#allocation2 + $0x8] sm:$0xff]
          %v912 = vld [vmem:[#allocation2 + $0x10] sm:$0xff]
          %v913 = vld [vmem:[#allocation2 + $0x18] sm:$0xff]
          %v914 = vld [vmem:[#allocation2 + $0x20] sm:$0xff]
          %v915 = vld [vmem:[#allocation2 + $0x28] sm:$0xff]
          %v916 = vld [vmem:[#allocation2 + $0x30] sm:$0xff]
          %v917 = vld [vmem:[#allocation2 + $0x38] sm:$0xff]
          %v918 = vld [vmem:[#allocation2 + $0x40] sm:$0xff]
          %v919 = vld [vmem:[#allocation2 + $0x48] sm:$0xff]
          %v920 = vld [vmem:[#allocation2 + $0x50] sm:$0xff]
          %v921 = vld [vmem:[#allocation2 + $0x58] sm:$0xff]
          %v922 = vld [vmem:[#allocation2 + $0x60] sm:$0xff]
          %v923 = vld [vmem:[#allocation2 + $0x68] sm:$0xff]
          %v924 = vld [vmem:[#allocation2 + $0x70] sm:$0xff]
          %v925 = vld [vmem:[#allocation2 + $0x78] sm:$0xff]
          %v926 = vld [vmem:[#allocation2 + $0x80] sm:$0xff]
          %v927 = vld [vmem:[#allocation2 + $0x88] sm:$0xff]
          %v928 = vld [vmem:[#allocation2 + $0x90] sm:$0xff]
          %v929 = vld [vmem:[#allocation2 + $0x98] sm:$0xff]
          %v930 = vld [vmem:[#allocation2 + $0xa0] sm:$0xff]
          %v931 = vld [vmem:[#allocation2 + $0xa8] sm:$0xff]
          %v932 = vld [vmem:[#allocation2 + $0xb0] sm:$0xff]
          %v933 = vld [vmem:[#allocation2 + $0xb8] sm:$0xff]
          %v934 = vld [vmem:[#allocation2 + $0xc0] sm:$0xff]
          %v935 = vld [vmem:[#allocation2 + $0xc8] sm:$0xff]
          %v936 = vld [vmem:[#allocation2 + $0xd0] sm:$0xff]
          %v937 = vld [vmem:[#allocation2 + $0xd8] sm:$0xff]
          %v938 = vld [vmem:[#allocation2 + $0xe0] sm:$0xff]
          %v939 = vld [vmem:[#allocation2 + $0xe8] sm:$0xff]
          %v940 = vld [vmem:[#allocation2 + $0xf0] sm:$0xff]
          %v941 = vld [vmem:[#allocation2 + $0xf8] sm:$0xff]
          %v942 = vpack.c.bf16 %v911, %v910
          %v943 = vpack.c.bf16 %v913, %v912
          %v944 = vpack.c.bf16 %v915, %v914
          %v945 = vpack.c.bf16 %v917, %v916
          %v946 = vpack.c.bf16 %v919, %v918
          %v947 = vpack.c.bf16 %v921, %v920
          %v948 = vpack.c.bf16 %v923, %v922
          %v949 = vpack.c.bf16 %v925, %v924
          %v950 = vpack.c.bf16 %v927, %v926
          %v951 = vpack.c.bf16 %v929, %v928
          %v952 = vpack.c.bf16 %v931, %v930
          %v953 = vpack.c.bf16 %v933, %v932
          %v954 = vpack.c.bf16 %v935, %v934
          %v955 = vpack.c.bf16 %v937, %v936
          %v956 = vpack.c.bf16 %v939, %v938
          %v957 = vpack.c.bf16 %v941, %v940
          %v958 = vld [vmem:[#allocation8] sm:$0xff]
          %v959 = vld [vmem:[#allocation8 + $0x8] sm:$0xff]
          %v960 = vld [vmem:[#allocation8 + $0x10] sm:$0xff]
          %v961 = vld [vmem:[#allocation8 + $0x18] sm:$0xff]
          %v962 = vld [vmem:[#allocation8 + $0x20] sm:$0xff]
          %v963 = vld [vmem:[#allocation8 + $0x28] sm:$0xff]
          %v964 = vld [vmem:[#allocation8 + $0x30] sm:$0xff]
          %v965 = vld [vmem:[#allocation8 + $0x38] sm:$0xff]
          %v966 = vld [vmem:[#allocation8 + $0x40] sm:$0xff]
          %v967 = vld [vmem:[#allocation8 + $0x48] sm:$0xff]
          %v968 = vld [vmem:[#allocation8 + $0x50] sm:$0xff]
          %v969 = vld [vmem:[#allocation8 + $0x58] sm:$0xff]
          %v970 = vld [vmem:[#allocation8 + $0x60] sm:$0xff]
          %v971 = vld [vmem:[#allocation8 + $0x68] sm:$0xff]
          %v972 = vld [vmem:[#allocation8 + $0x70] sm:$0xff]
          %v973 = vld [vmem:[#allocation8 + $0x78] sm:$0xff]
          %v974 = vld [vmem:[%s3] sm:$0x3]
          %v976 = vperm.slane %v974, 0
          %v977 = vperm.slane %v974, 1
          %v996 = vunpack.c.l.b16 %v958
          %v997 = vunpack.c.h.b16 %v958
          %v998 = vunpack.c.l.b16 %v959
          %v999 = vunpack.c.h.b16 %v959
          %v1000 = vunpack.c.l.b16 %v960
          %v1001 = vunpack.c.h.b16 %v960
          %v1002 = vunpack.c.l.b16 %v961
          %v1003 = vunpack.c.h.b16 %v961
          %v1004 = vunpack.c.l.b16 %v962
          %v1005 = vunpack.c.h.b16 %v962
          %v1006 = vunpack.c.l.b16 %v963
          %v1007 = vunpack.c.h.b16 %v963
          %v1008 = vunpack.c.l.b16 %v964
          %v1009 = vunpack.c.h.b16 %v964
          %v1010 = vunpack.c.l.b16 %v965
          %v1011 = vunpack.c.h.b16 %v965
          %v1012 = vunpack.c.l.b16 %v966
          %v1013 = vunpack.c.h.b16 %v966
          %v1014 = vunpack.c.l.b16 %v967
          %v1015 = vunpack.c.h.b16 %v967
          %v1016 = vunpack.c.l.b16 %v968
          %v1017 = vunpack.c.h.b16 %v968
          %v1018 = vunpack.c.l.b16 %v969
          %v1019 = vunpack.c.h.b16 %v969
          %v1020 = vunpack.c.l.b16 %v970
          %v1021 = vunpack.c.h.b16 %v970
          %v1022 = vunpack.c.l.b16 %v971
          %v1023 = vunpack.c.h.b16 %v971
          %v1024 = vunpack.c.l.b16 %v972
          %v1025 = vunpack.c.h.b16 %v972
          %v1026 = vunpack.c.l.b16 %v973
          %v1027 = vunpack.c.h.b16 %v973
          %v1028 = vpack.c.b16 %v998, %v996
          %v1029 = vpack.c.b16 %v999, %v997
          %v1030 = vpack.c.b16 %v1002, %v1000
          %v1031 = vpack.c.b16 %v1003, %v1001
          %v1032 = vpack.c.b16 %v1006, %v1004
          %v1033 = vpack.c.b16 %v1007, %v1005
          %v1034 = vpack.c.b16 %v1010, %v1008
          %v1035 = vpack.c.b16 %v1011, %v1009
          %v1036 = vpack.c.b16 %v1014, %v1012
          %v1037 = vpack.c.b16 %v1015, %v1013
          %v1038 = vpack.c.b16 %v1018, %v1016
          %v1039 = vpack.c.b16 %v1019, %v1017
          %v1040 = vpack.c.b16 %v1022, %v1020
          %v1041 = vpack.c.b16 %v1023, %v1021
          %v1042 = vpack.c.b16 %v1026, %v1024
          %v1043 = vpack.c.b16 %v1027, %v1025
          %1060 = vmatpush.bf16.msra.mxu0 %v1042
          %1061 = vmatpush.bf16.msra.mxu0 %v1040
          %1062 = vmatpush.bf16.msra.mxu0 %v1038
          %1063 = vmatpush.bf16.msra.mxu0 %v1036
          %1064 = vmatpush.bf16.msra.mxu0 %v1034
          %1065 = vmatpush.bf16.msra.mxu0 %v1032
          %1066 = vmatpush.bf16.msra.mxu0 %v1030
          %1067 = vmatpush.bf16.msra.mxu0 %v1028
          %1068 = vmatmul.bf16.gmra.mxu0 %v942
          %v1069 = vpop.f32.mrf.mxu0
          %v1070 = vadd.f32 %v976, %v1069
          %v1071 = vpop.f32.mrf.mxu0
          %v1072 = vadd.f32 %v976, %v1071
          %1073 = vmatmul.bf16.gmra.mxu0 %v943
          %v1074 = vpop.f32.mrf.mxu0
          %v1075 = vadd.f32 %v976, %v1074
          %v1076 = vpop.f32.mrf.mxu0
          %v1077 = vadd.f32 %v976, %v1076
          %1078 = vmatmul.bf16.gmra.mxu0 %v944
          %v1079 = vpop.f32.mrf.mxu0
          %v1080 = vadd.f32 %v976, %v1079
          %v1081 = vpop.f32.mrf.mxu0
          %v1082 = vadd.f32 %v976, %v1081
          %1083 = vmatmul.bf16.gmra.mxu0 %v945
          %v1084 = vpop.f32.mrf.mxu0
          %v1085 = vadd.f32 %v976, %v1084
          %v1086 = vpop.f32.mrf.mxu0
          %v1087 = vadd.f32 %v976, %v1086
          %1088 = vmatmul.bf16.gmra.mxu0 %v946
          %v1089 = vpop.f32.mrf.mxu0
          %v1090 = vadd.f32 %v976, %v1089
          %v1091 = vpop.f32.mrf.mxu0
          %v1092 = vadd.f32 %v976, %v1091
          %1093 = vmatmul.bf16.gmra.mxu0 %v947
          %v1094 = vpop.f32.mrf.mxu0
          %v1095 = vadd.f32 %v976, %v1094
          %v1096 = vpop.f32.mrf.mxu0
          %v1097 = vadd.f32 %v976, %v1096
          %1098 = vmatmul.bf16.gmra.mxu0 %v948
          %v1099 = vpop.f32.mrf.mxu0
          %v1100 = vadd.f32 %v976, %v1099
          %v1101 = vpop.f32.mrf.mxu0
          %v1102 = vadd.f32 %v976, %v1101
          %1103 = vmatmul.bf16.gmra.mxu0 %v949
          %v1104 = vpop.f32.mrf.mxu0
          %v1105 = vadd.f32 %v976, %v1104
          %v1106 = vpop.f32.mrf.mxu0
          %v1107 = vadd.f32 %v976, %v1106
          %1108 = vmatmul.bf16.gmra.mxu0 %v950
          %v1109 = vpop.f32.mrf.mxu0
          %v1110 = vadd.f32 %v976, %v1109
          %v1111 = vpop.f32.mrf.mxu0
          %v1112 = vadd.f32 %v976, %v1111
          %1113 = vmatmul.bf16.gmra.mxu0 %v951
          %v1114 = vpop.f32.mrf.mxu0
          %v1115 = vadd.f32 %v976, %v1114
          %v1116 = vpop.f32.mrf.mxu0
          %v1117 = vadd.f32 %v976, %v1116
          %1118 = vmatmul.bf16.gmra.mxu0 %v952
          %v1119 = vpop.f32.mrf.mxu0
          %v1120 = vadd.f32 %v976, %v1119
          %v1121 = vpop.f32.mrf.mxu0
          %v1122 = vadd.f32 %v976, %v1121
          %1123 = vmatmul.bf16.gmra.mxu0 %v953
          %v1124 = vpop.f32.mrf.mxu0
          %v1125 = vadd.f32 %v976, %v1124
          %v1126 = vpop.f32.mrf.mxu0
          %v1127 = vadd.f32 %v976, %v1126
          %1128 = vmatmul.bf16.gmra.mxu0 %v954
          %v1129 = vpop.f32.mrf.mxu0
          %v1130 = vadd.f32 %v976, %v1129
          %v1131 = vpop.f32.mrf.mxu0
          %v1132 = vadd.f32 %v976, %v1131
          %1133 = vmatmul.bf16.gmra.mxu0 %v955
          %v1134 = vpop.f32.mrf.mxu0
          %v1135 = vadd.f32 %v976, %v1134
          %v1136 = vpop.f32.mrf.mxu0
          %v1137 = vadd.f32 %v976, %v1136
          %1138 = vmatmul.bf16.gmra.mxu0 %v956
          %v1139 = vpop.f32.mrf.mxu0
          %v1140 = vadd.f32 %v976, %v1139
          %v1141 = vpop.f32.mrf.mxu0
          %v1142 = vadd.f32 %v976, %v1141
          %1143 = vmatmul.bf16.gmra.mxu0 %v957
          %v1144 = vpop.f32.mrf.mxu0
          %v1145 = vadd.f32 %v976, %v1144
          %v1146 = vpop.f32.mrf.mxu0
          %v1147 = vadd.f32 %v976, %v1146
          %1148 = vdwg.mxu0
          %1149 = vmatpush.bf16.msra.mxu0 %v1043
          %1150 = vmatpush.bf16.msra.mxu0 %v1041
          %1151 = vmatpush.bf16.msra.mxu0 %v1039
          %1152 = vmatpush.bf16.msra.mxu0 %v1037
          %1153 = vmatpush.bf16.msra.mxu0 %v1035
          %1154 = vmatpush.bf16.msra.mxu0 %v1033
          %1155 = vmatpush.bf16.msra.mxu0 %v1031
          %1156 = vmatpush.bf16.msra.mxu0 %v1029
          %1157 = vmatmul.bf16.gmra.mxu0 %v942
          %v1158 = vpop.f32.mrf.mxu0
          %v1159 = vadd.f32 %v977, %v1158
          %v1160 = vpop.f32.mrf.mxu0
          %v1161 = vadd.f32 %v977, %v1160
          %1162 = vmatmul.bf16.gmra.mxu0 %v943
          %v1163 = vpop.f32.mrf.mxu0
          %v1164 = vadd.f32 %v977, %v1163
          %v1165 = vpop.f32.mrf.mxu0
          %v1166 = vadd.f32 %v977, %v1165
          %1167 = vmatmul.bf16.gmra.mxu0 %v944
          %v1168 = vpop.f32.mrf.mxu0
          %v1169 = vadd.f32 %v977, %v1168
          %v1170 = vpop.f32.mrf.mxu0
          %v1171 = vadd.f32 %v977, %v1170
          %1172 = vmatmul.bf16.gmra.mxu0 %v945
          %v1173 = vpop.f32.mrf.mxu0
          %v1174 = vadd.f32 %v977, %v1173
          %v1175 = vpop.f32.mrf.mxu0
          %v1176 = vadd.f32 %v977, %v1175
          %1177 = vmatmul.bf16.gmra.mxu0 %v946
          %v1178 = vpop.f32.mrf.mxu0
          %v1179 = vadd.f32 %v977, %v1178
          %v1180 = vpop.f32.mrf.mxu0
          %v1181 = vadd.f32 %v977, %v1180
          %1182 = vmatmul.bf16.gmra.mxu0 %v947
          %v1183 = vpop.f32.mrf.mxu0
          %v1184 = vadd.f32 %v977, %v1183
          %v1185 = vpop.f32.mrf.mxu0
          %v1186 = vadd.f32 %v977, %v1185
          %1187 = vmatmul.bf16.gmra.mxu0 %v948
          %v1188 = vpop.f32.mrf.mxu0
          %v1189 = vadd.f32 %v977, %v1188
          %v1190 = vpop.f32.mrf.mxu0
          %v1191 = vadd.f32 %v977, %v1190
          %1192 = vmatmul.bf16.gmra.mxu0 %v949
          %v1193 = vpop.f32.mrf.mxu0
          %v1194 = vadd.f32 %v977, %v1193
          %v1195 = vpop.f32.mrf.mxu0
          %v1196 = vadd.f32 %v977, %v1195
          %1197 = vmatmul.bf16.gmra.mxu0 %v950
          %v1198 = vpop.f32.mrf.mxu0
          %v1199 = vadd.f32 %v977, %v1198
          %v1200 = vpop.f32.mrf.mxu0
          %v1201 = vadd.f32 %v977, %v1200
          %1202 = vmatmul.bf16.gmra.mxu0 %v951
          %v1203 = vpop.f32.mrf.mxu0
          %v1204 = vadd.f32 %v977, %v1203
          %v1205 = vpop.f32.mrf.mxu0
          %v1206 = vadd.f32 %v977, %v1205
          %1207 = vmatmul.bf16.gmra.mxu0 %v952
          %v1208 = vpop.f32.mrf.mxu0
          %v1209 = vadd.f32 %v977, %v1208
          %v1210 = vpop.f32.mrf.mxu0
          %v1211 = vadd.f32 %v977, %v1210
          %1212 = vmatmul.bf16.gmra.mxu0 %v953
          %v1213 = vpop.f32.mrf.mxu0
          %v1214 = vadd.f32 %v977, %v1213
          %v1215 = vpop.f32.mrf.mxu0
          %v1216 = vadd.f32 %v977, %v1215
          %1217 = vmatmul.bf16.gmra.mxu0 %v954
          %v1218 = vpop.f32.mrf.mxu0
          %v1219 = vadd.f32 %v977, %v1218
          %v1220 = vpop.f32.mrf.mxu0
          %v1221 = vadd.f32 %v977, %v1220
          %1222 = vmatmul.bf16.gmra.mxu0 %v955
          %v1223 = vpop.f32.mrf.mxu0
          %v1224 = vadd.f32 %v977, %v1223
          %v1225 = vpop.f32.mrf.mxu0
          %v1226 = vadd.f32 %v977, %v1225
          %1227 = vmatmul.bf16.gmra.mxu0 %v956
          %v1228 = vpop.f32.mrf.mxu0
          %v1229 = vadd.f32 %v977, %v1228
          %v1230 = vpop.f32.mrf.mxu0
          %v1231 = vadd.f32 %v977, %v1230
          %1232 = vmatmul.bf16.gmra.mxu0 %v957
          %v1233 = vpop.f32.mrf.mxu0
          %v1234 = vadd.f32 %v977, %v1233
          %v1235 = vpop.f32.mrf.mxu0
          %v1236 = vadd.f32 %v977, %v1235
          %1237 = vdwg.mxu0
          %v1238 = vmax.f32 %v1070, 0.0
          %v1239 = vmax.f32 %v1159, 0.0
          %v1240 = vmax.f32 %v1072, 0.0
          %v1241 = vmax.f32 %v1161, 0.0
          %v1242 = vmax.f32 %v1075, 0.0
          %v1243 = vmax.f32 %v1164, 0.0
          %v1244 = vmax.f32 %v1077, 0.0
          %v1245 = vmax.f32 %v1166, 0.0
          %v1246 = vmax.f32 %v1080, 0.0
          %v1247 = vmax.f32 %v1169, 0.0
          %v1248 = vmax.f32 %v1082, 0.0
          %v1249 = vmax.f32 %v1171, 0.0
          %v1250 = vmax.f32 %v1085, 0.0
          %v1251 = vmax.f32 %v1174, 0.0
          %v1252 = vmax.f32 %v1087, 0.0
          %v1253 = vmax.f32 %v1176, 0.0
          %v1254 = vmax.f32 %v1090, 0.0
          %v1255 = vmax.f32 %v1179, 0.0
          %v1256 = vmax.f32 %v1092, 0.0
          %v1257 = vmax.f32 %v1181, 0.0
          %v1258 = vmax.f32 %v1095, 0.0
          %v1259 = vmax.f32 %v1184, 0.0
          %v1260 = vmax.f32 %v1097, 0.0
          %v1261 = vmax.f32 %v1186, 0.0
          %v1262 = vmax.f32 %v1100, 0.0
          %v1263 = vmax.f32 %v1189, 0.0
          %v1264 = vmax.f32 %v1102, 0.0
          %v1265 = vmax.f32 %v1191, 0.0
          %v1266 = vmax.f32 %v1105, 0.0
          %v1267 = vmax.f32 %v1194, 0.0
          %v1268 = vmax.f32 %v1107, 0.0
          %v1269 = vmax.f32 %v1196, 0.0
          %v1270 = vmax.f32 %v1110, 0.0
          %v1271 = vmax.f32 %v1199, 0.0
          %v1272 = vmax.f32 %v1112, 0.0
          %v1273 = vmax.f32 %v1201, 0.0
          %v1274 = vmax.f32 %v1115, 0.0
          %v1275 = vmax.f32 %v1204, 0.0
          %v1276 = vmax.f32 %v1117, 0.0
          %v1277 = vmax.f32 %v1206, 0.0
          %v1278 = vmax.f32 %v1120, 0.0
          %v1279 = vmax.f32 %v1209, 0.0
          %v1280 = vmax.f32 %v1122, 0.0
          %v1281 = vmax.f32 %v1211, 0.0
          %v1282 = vmax.f32 %v1125, 0.0
          %v1283 = vmax.f32 %v1214, 0.0
          %v1284 = vmax.f32 %v1127, 0.0
          %v1285 = vmax.f32 %v1216, 0.0
          %v1286 = vmax.f32 %v1130, 0.0
          %v1287 = vmax.f32 %v1219, 0.0
          %v1288 = vmax.f32 %v1132, 0.0
          %v1289 = vmax.f32 %v1221, 0.0
          %v1290 = vmax.f32 %v1135, 0.0
          %v1291 = vmax.f32 %v1224, 0.0
          %v1292 = vmax.f32 %v1137, 0.0
          %v1293 = vmax.f32 %v1226, 0.0
          %v1294 = vmax.f32 %v1140, 0.0
          %v1295 = vmax.f32 %v1229, 0.0
          %v1296 = vmax.f32 %v1142, 0.0
          %v1297 = vmax.f32 %v1231, 0.0
          %v1298 = vmax.f32 %v1145, 0.0
          %v1299 = vmax.f32 %v1234, 0.0
          %v1300 = vmax.f32 %v1147, 0.0
          %v1301 = vmax.f32 %v1236, 0.0
          %v1302 = vpack.c.bf16 %v1239, %v1238
          %v1303 = vpack.c.bf16 %v1241, %v1240
          %v1304 = vpack.c.bf16 %v1243, %v1242
          %v1305 = vpack.c.bf16 %v1245, %v1244
          %v1306 = vpack.c.bf16 %v1247, %v1246
          %v1307 = vpack.c.bf16 %v1249, %v1248
          %v1308 = vpack.c.bf16 %v1251, %v1250
          %v1309 = vpack.c.bf16 %v1253, %v1252
          %v1310 = vpack.c.bf16 %v1255, %v1254
          %v1311 = vpack.c.bf16 %v1257, %v1256
          %v1312 = vpack.c.bf16 %v1259, %v1258
          %v1313 = vpack.c.bf16 %v1261, %v1260
          %v1314 = vpack.c.bf16 %v1263, %v1262
          %v1315 = vpack.c.bf16 %v1265, %v1264
          %v1316 = vpack.c.bf16 %v1267, %v1266
          %v1317 = vpack.c.bf16 %v1269, %v1268
          %v1318 = vpack.c.bf16 %v1271, %v1270
          %v1319 = vpack.c.bf16 %v1273, %v1272
          %v1320 = vpack.c.bf16 %v1275, %v1274
          %v1321 = vpack.c.bf16 %v1277, %v1276
          %v1322 = vpack.c.bf16 %v1279, %v1278
          %v1323 = vpack.c.bf16 %v1281, %v1280
          %v1324 = vpack.c.bf16 %v1283, %v1282
          %v1325 = vpack.c.bf16 %v1285, %v1284
          %v1326 = vpack.c.bf16 %v1287, %v1286
          %v1327 = vpack.c.bf16 %v1289, %v1288
          %v1328 = vpack.c.bf16 %v1291, %v1290
          %v1329 = vpack.c.bf16 %v1293, %v1292
          %v1330 = vpack.c.bf16 %v1295, %v1294
          %v1331 = vpack.c.bf16 %v1297, %v1296
          %v1332 = vpack.c.bf16 %v1299, %v1298
          %v1333 = vpack.c.bf16 %v1301, %v1300
          %1334 = vst [vmem:[%s267] sm:$0xff] %v1302
          %1335 = vst [vmem:[%s267 + $0x8] sm:$0xff] %v1303
          %1336 = vst [vmem:[%s267 + $0x10] sm:$0xff] %v1304
          %1337 = vst [vmem:[%s267 + $0x18] sm:$0xff] %v1305
          %1338 = vst [vmem:[%s267 + $0x20] sm:$0xff] %v1306
          %1339 = vst [vmem:[%s267 + $0x28] sm:$0xff] %v1307
          %1340 = vst [vmem:[%s267 + $0x30] sm:$0xff] %v1308
          %1341 = vst [vmem:[%s267 + $0x38] sm:$0xff] %v1309
          %1342 = vst [vmem:[%s267 + $0x40] sm:$0xff] %v1310
          %1343 = vst [vmem:[%s267 + $0x48] sm:$0xff] %v1311
          %1344 = vst [vmem:[%s267 + $0x50] sm:$0xff] %v1312
          %1345 = vst [vmem:[%s267 + $0x58] sm:$0xff] %v1313
          %1346 = vst [vmem:[%s267 + $0x60] sm:$0xff] %v1314
          %1347 = vst [vmem:[%s267 + $0x68] sm:$0xff] %v1315
          %1348 = vst [vmem:[%s267 + $0x70] sm:$0xff] %v1316
          %1349 = vst [vmem:[%s267 + $0x78] sm:$0xff] %v1317
          %1350 = vst [vmem:[%s267 + $0x80] sm:$0xff] %v1318
          %1351 = vst [vmem:[%s267 + $0x88] sm:$0xff] %v1319
          %1352 = vst [vmem:[%s267 + $0x90] sm:$0xff] %v1320
          %1353 = vst [vmem:[%s267 + $0x98] sm:$0xff] %v1321
          %1354 = vst [vmem:[%s267 + $0xa0] sm:$0xff] %v1322
          %1355 = vst [vmem:[%s267 + $0xa8] sm:$0xff] %v1323
          %1356 = vst [vmem:[%s267 + $0xb0] sm:$0xff] %v1324
          %1357 = vst [vmem:[%s267 + $0xb8] sm:$0xff] %v1325
          %1358 = vst [vmem:[%s267 + $0xc0] sm:$0xff] %v1326
          %1359 = vst [vmem:[%s267 + $0xc8] sm:$0xff] %v1327
          %1360 = vst [vmem:[%s267 + $0xd0] sm:$0xff] %v1328
          %1361 = vst [vmem:[%s267 + $0xd8] sm:$0xff] %v1329
          %1362 = vst [vmem:[%s267 + $0xe0] sm:$0xff] %v1330
          %1363 = vst [vmem:[%s267 + $0xe8] sm:$0xff] %v1331
          %1364 = vst [vmem:[%s267 + $0xf0] sm:$0xff] %v1332
          %1365 = vst [vmem:[%s267 + $0xf8] sm:$0xff] %v1333
        $region56: #{tpu_custom_call.1} parent=35 // pred_fallthru
          _
        %s1366 = sand.u32 %s133, 1
        %s1367 = scalar_lea.sflag [#allocation5], %s1366
        %s1368 = sand.u32 %s133, 1
        %s1369 = smul.addr %s1368, 256
        %s1370 = scalar_lea.vmem [#allocation9], %s1369
        // Predicated region
        $region57: #{tpu_custom_call.1} parent=35 // pred_check
          %p1371 = pneg %p143
        $region58: #{tpu_custom_call.1} parent=35 // pred_check_branch
          %1373 = sbr.rel (%p1371) target = $region60
        $region59: #{tpu_custom_call.1} parent=35 // pred_region
          %s1374 = smul.u32 32, %s26
          %1376 = vsyncadd %s1367, 0
          %s1377 = smul.addr %s1374, 2
          %s1378 = smul.addr %s1377, 4
          %s1379 = scalar_lea.hbm %s4, %s1378
          %s1380 = sshll.u32 %s1370, 4
          %s1381 = int_to_ptr.vmem [resolvable:$true] %s1380
          %s1382 = sshll.u32 %s1379, 4
          %s1383 = int_to_ptr.hbm [resolvable:$true] %s1382
          %1388 = dma.vmem_to_hbm [thread:$0]  %s1381, 4096, %s1383, %s1367, 128, 128, 8
        $region60: #{tpu_custom_call.1} parent=35 // pred_fallthru
          _
      $region36: #{tpu_custom_call.1} parent=5 // pred_fallthru
        _
      %p1389 = scmp.le.s32.totalorder 2, %s17
      // Predicated region
      $region61: #{tpu_custom_call.1} parent=5 // pred_check
        %p1390 = pneg %p1389
      $region62: #{tpu_custom_call.1} parent=5 // pred_check_branch
        %1392 = sbr.rel (%p1390) target = $region64
      $region63: #{tpu_custom_call.1} parent=5 // pred_region
        %s1393 = ssub.s32 %s17, 2
        // Predicated region
        $region65: #{tpu_custom_call.1} parent=63 // pred_check
          %p1394 = pneg %p149
        $region66: #{tpu_custom_call.1} parent=63 // pred_check_branch
          %1396 = sbr.rel (%p1394) target = $region68
        $region67: #{tpu_custom_call.1} parent=63 // pred_region
          %s1397 = sand.u32 %s134, 1
          %s1398 = scalar_lea.sflag [#allocation5], %s1397
          %s1399 = sand.u32 %s134, 1
          %s1400 = smul.addr %s1399, 256
          %s1401 = scalar_lea.vmem [#allocation9], %s1400
          %1403 = dma.done %s1398, 4096
        $region68: #{tpu_custom_call.1} parent=63 // pred_fallthru
          _
      $region64: #{tpu_custom_call.1} parent=5 // pred_fallthru
        _
    $region6: #{tpu_custom_call.1} parent=1 // loop_footer
      %s21 = sadd.s32 1, %s17
    $region7: #{tpu_custom_call.1} parent=1 // loop_footer_branch
      %16 = sbr.rel target = $region3
    $region8: #{tpu_custom_call.1} parent=1 // loop_exit
      _
    %1404 = vsyncpa [#allocation4], 1
    %s1405 = scalar_lea.sflag [#allocation4], 1
    %1406 = vsyncpa %s1405, 1
    %1407 = vsyncpa [#allocation7], 1
    %1408 = vsyncpa [#allocation5], 1
    %s1409 = scalar_lea.sflag [#allocation5], 1
    %1410 = vsyncpa %s1409, 1

</llo_original>
